<compile_context>
chip_gen: v5e
topology: v5e:2x2
jax: 0.10.0
libtpu: 0.0.40
codegen_flags: <defaults>
</compile_context>

<pallas_src>
import jax
import jax.numpy as jnp
from jax import lax
from jax.experimental import pallas as pl
from jax.experimental.pallas import tpu as pltpu


def _gather_l2norm_kernel(pid_ref, x_ref, o_ref):
    # pid_ref: (P,) int32, SMEM (scalar-prefetched patch ids)
    # x_ref:   (L, N) f32, full feat slab resident in VMEM (same block every step)
    # o_ref:   (TP, N) f32, this step's block of gathered + normalized rows
    tp = o_ref.shape[0]
    base = pl.program_id(0) * tp

    # Gather TP rows. j is static (tiny unrolled copy loop, no carried values);
    # only the source row index is dynamic (scalar read from SMEM).
    for j in range(tp):
        o_ref[pl.ds(j, 1), :] = x_ref[pl.ds(pid_ref[base + j], 1), :]

    # Vectorized Normalize(power=2) on the gathered (TP, N) tile.
    rows = o_ref[...].astype(jnp.float32)
    norm = jnp.sqrt(jnp.sum(rows * rows, axis=-1, keepdims=True))
    inv = pl.reciprocal(norm + 1e-7)  # exact; one recip per row, VPU multiplies
    o_ref[...] = (rows * inv).astype(o_ref.dtype)


def _pick_row_block(num_rows):
    """Prefer a few sublane-full row blocks (parallel grid axis for v7x megacore)."""
    for tp in (32, 16, 8):
        if num_rows % tp == 0 and num_rows // tp >= 2:
            return tp
    return num_rows  # single block (block_shape == full array dims is legal)


def gather_and_l2norm(feat_flat, patch_id):
    """feat_flat: (L, N) f32, patch_id: (P,) int32 -> (P, N) L2-normalized rows."""
    L, N = feat_flat.shape
    P = patch_id.shape[0]

    tp = _pick_row_block(P)
    grid = (P // tp,)

    # VMEM footprint at these shapes: <= 2 MiB slab (double-buffered -> <= 4 MiB)
    # + tiny output blocks; comfortably within default scoped VMEM on v5e/v6e/v7x.
    # TODO(synk): for production-sized features, tile the N axis in 512-1024-lane
    # chunks (keeping gathered rows resident) and raise vmem_limit_bytes.
    return pl.pallas_call(
        _gather_l2norm_kernel,
        out_shape=jax.ShapeDtypeStruct((P, N), feat_flat.dtype),
        grid_spec=pltpu.PrefetchScalarGridSpec(
            num_scalar_prefetch=1,
            grid=grid,
            # Whole feat slab as one block, same index every step -> stays resident.
            in_specs=[pl.BlockSpec((L, N), lambda i, ids: (0, 0))],
            out_specs=pl.BlockSpec((tp, N), lambda i, ids: (i, 0)),
        ),
        compiler_params=pltpu.CompilerParams(
            dimension_semantics=("parallel",)),  # row blocks are independent
    )(patch_id, feat_flat)


def _torch_unfold(x, dim, size, step):
    """Replicates torch.Tensor.unfold(dim, size, step)."""
    n = (x.shape[dim] - size) // step + 1
    if step == size:
        # Non-overlapping windows (the module default): pure reshape, no gather.
        x = lax.slice_in_dim(x, 0, n * size, axis=dim)
        new_shape = x.shape[:dim] + (n, size) + x.shape[dim + 1:]
        y = x.reshape(new_shape)
        return jnp.moveaxis(y, dim + 1, -1)
    idx = jnp.arange(n)[:, None] * step + jnp.arange(size)[None, :]  # (n, size)
    y = jnp.take(x, idx, axis=dim)      # dim is replaced by (n, size)
    return jnp.moveaxis(y, dim + 1, -1)  # new `size` axis goes to the end


def patch_sample_f_forward(feat, num_patches=64, patch_ids=None,
                           stride=16, patchsize=16, *, rng_key=None):
    """JAX/Pallas port of PatchSampleF.forward with the default use_mlp=False."""
    # TODO(synk): the use_mlp=True branch (Linear->ReLU->Linear per scale) and the
    # num_patches==0 passthrough branch are not exercised by the default module
    # configuration and are omitted here.
    return_ids = []
    return_feats = []
    feats = []
    ps, st = patchsize, stride
    for _ in range(1, 4):
        patches = _torch_unfold(_torch_unfold(feat, 2, ps, st), 3, ps, st)
        feats.append(patches.reshape(1, -1, ps, ps))
        ps *= 2
        st *= 2

    for feat_id, f in enumerate(feats):
        Np = f.shape[1]
        Hs, Ws = f.shape[2], f.shape[3]
        # (1, Np, H, W) -> (1, H, W, Np) -> (H*W, Np)
        feat_reshape = jnp.transpose(f, (0, 2, 3, 1)).reshape(Hs * Ws, Np)
        L = feat_reshape.shape[0]
        if patch_ids is not None:
            # Clamp caller-supplied ids: in-kernel VMEM reads have no bounds check.
            patch_id = jnp.clip(
                jnp.asarray(patch_ids[feat_id], dtype=jnp.int32), 0, L - 1)
        else:
            rng_key, sub = jax.random.split(rng_key)
            perm = jax.random.permutation(sub, L)
            patch_id = perm[: int(min(num_patches, L))].astype(jnp.int32)
        # Hot path (gather + Normalize(2)) runs in the Pallas kernel.
        x_sample = gather_and_l2norm(feat_reshape, patch_id)  # (P, Np)
        return_ids.append(patch_id)
        return_feats.append(x_sample)
    return return_feats, return_ids


if __name__ == "__main__":
    key = jax.random.PRNGKey(0)
    k_feat, k_perm = jax.random.split(key)
    # H, W must be >= 64 so the third scale (patchsize=64) is valid, as in torch.
    B, C, H, W = 2, 4, 64, 64
    feat = jax.random.normal(k_feat, (B, C, H, W), dtype=jnp.float32)

    # Jit end-to-end: one compiled graph for all three scales (amortizes launch cost).
    fwd = jax.jit(lambda x, k: patch_sample_f_forward(x, num_patches=64, rng_key=k))
    feats_out, ids_out = fwd(feat, k_perm)
    jax.block_until_ready(feats_out)

    # Pure-JAX reference check of the fused gather + l2norm.
    ps, st = 16, 16
    ref_feats = []
    for _ in range(3):
        patches = _torch_unfold(_torch_unfold(feat, 2, ps, st), 3, ps, st)
        ref_feats.append(patches.reshape(1, -1, ps, ps))
        ps *= 2
        st *= 2
    for i, f in enumerate(ref_feats):
        Hs, Ws, Np = f.shape[2], f.shape[3], f.shape[1]
        fr = jnp.transpose(f, (0, 2, 3, 1)).reshape(Hs * Ws, Np)
        xs = fr[ids_out[i], :]
        norm = jnp.sqrt(jnp.sum(xs * xs, axis=-1, keepdims=True))
        ref = xs / (norm + 1e-7)
        assert feats_out[i].shape == ref.shape, f"shape mismatch at scale {i}"
        assert jnp.allclose(feats_out[i], ref, atol=1e-5, rtol=1e-5), \
            f"value mismatch at scale {i}"

    print("KERNEL_OK")
</pallas_src>

<mosaic_0001>
module attributes {stable_mosaic.version = 11 : i64} {
  func.func @_gather_l2norm_kernel(%arg0: i32, %arg1: memref<64xi32, #tpu.memory_space<smem>>, %arg2: memref<4096x8xf32, #tpu.memory_space<vmem>>, %arg3: memref<32x8xf32, #tpu.memory_space<vmem>>) attributes {dimension_semantics = [#tpu.dimension_semantics<parallel>], iteration_bounds = array<i64: 2>, scalar_prefetch = 1 : i64, scratch_operands = 0 : i64, tpu.core_type = #tpu.core_type<tc>, window_params = [{pipeline_mode = #tpu.pipeline_mode<synchronous>, transform_indices = @transform_0, window_bounds = array<i64: 4096, 8>}, {transform_indices = @transform_1, window_bounds = array<i64: 32, 8>}]} {
    %c32_i32 = arith.constant 32 : i32
    %0 = arith.muli %arg0, %c32_i32 : i32
    %c0_i32 = arith.constant 0 : i32
    %1 = arith.addi %0, %c0_i32 : i32
    %2 = arith.index_cast %1 : i32 to index
    %3 = memref.load %arg1[%2] : memref<64xi32, #tpu.memory_space<smem>>
    %4 = arith.index_cast %3 : i32 to index
    %c0 = arith.constant 0 : index
    %5 = vector.load %arg2[%4, %c0] : memref<4096x8xf32, #tpu.memory_space<vmem>>, vector<1x8xf32>
    %c0_0 = arith.constant 0 : index
    %c0_1 = arith.constant 0 : index
    %6 = vector.load %arg3[%c0_0, %c0_1] : memref<32x8xf32, #tpu.memory_space<vmem>>, vector<1x8xf32>
    tpu.vector_store %arg3[%c0_0, %c0_1], %5 {strides = array<i32>} : memref<32x8xf32, #tpu.memory_space<vmem>>, vector<1x8xf32>,
    %c1_i32 = arith.constant 1 : i32
    %7 = arith.addi %0, %c1_i32 : i32
    %8 = arith.index_cast %7 : i32 to index
    %9 = memref.load %arg1[%8] : memref<64xi32, #tpu.memory_space<smem>>
    %10 = arith.index_cast %9 : i32 to index
    %c0_2 = arith.constant 0 : index
    %11 = vector.load %arg2[%10, %c0_2] : memref<4096x8xf32, #tpu.memory_space<vmem>>, vector<1x8xf32>
    %c1 = arith.constant 1 : index
    %c0_3 = arith.constant 0 : index
    %12 = vector.load %arg3[%c1, %c0_3] : memref<32x8xf32, #tpu.memory_space<vmem>>, vector<1x8xf32>
    tpu.vector_store %arg3[%c1, %c0_3], %11 {strides = array<i32>} : memref<32x8xf32, #tpu.memory_space<vmem>>, vector<1x8xf32>,
    %c2_i32 = arith.constant 2 : i32
    %13 = arith.addi %0, %c2_i32 : i32
    %14 = arith.index_cast %13 : i32 to index
    %15 = memref.load %arg1[%14] : memref<64xi32, #tpu.memory_space<smem>>
    %16 = arith.index_cast %15 : i32 to index
    %c0_4 = arith.constant 0 : index
    %17 = vector.load %arg2[%16, %c0_4] : memref<4096x8xf32, #tpu.memory_space<vmem>>, vector<1x8xf32>
    %c2 = arith.constant 2 : index
    %c0_5 = arith.constant 0 : index
    %18 = vector.load %arg3[%c2, %c0_5] : memref<32x8xf32, #tpu.memory_space<vmem>>, vector<1x8xf32>
    tpu.vector_store %arg3[%c2, %c0_5], %17 {strides = array<i32>} : memref<32x8xf32, #tpu.memory_space<vmem>>, vector<1x8xf32>,
    %c3_i32 = arith.constant 3 : i32
    %19 = arith.addi %0, %c3_i32 : i32
    %20 = arith.index_cast %19 : i32 to index
    %21 = memref.load %arg1[%20] : memref<64xi32, #tpu.memory_space<smem>>
    %22 = arith.index_cast %21 : i32 to index
    %c0_6 = arith.constant 0 : index
    %23 = vector.load %arg2[%22, %c0_6] : memref<4096x8xf32, #tpu.memory_space<vmem>>, vector<1x8xf32>
    %c3 = arith.constant 3 : index
    %c0_7 = arith.constant 0 : index
    %24 = vector.load %arg3[%c3, %c0_7] : memref<32x8xf32, #tpu.memory_space<vmem>>, vector<1x8xf32>
    tpu.vector_store %arg3[%c3, %c0_7], %23 {strides = array<i32>} : memref<32x8xf32, #tpu.memory_space<vmem>>, vector<1x8xf32>,
    %c4_i32 = arith.constant 4 : i32
    %25 = arith.addi %0, %c4_i32 : i32
    %26 = arith.index_cast %25 : i32 to index
    %27 = memref.load %arg1[%26] : memref<64xi32, #tpu.memory_space<smem>>
    %28 = arith.index_cast %27 : i32 to index
    %c0_8 = arith.constant 0 : index
    %29 = vector.load %arg2[%28, %c0_8] : memref<4096x8xf32, #tpu.memory_space<vmem>>, vector<1x8xf32>
    %c4 = arith.constant 4 : index
    %c0_9 = arith.constant 0 : index
    %30 = vector.load %arg3[%c4, %c0_9] : memref<32x8xf32, #tpu.memory_space<vmem>>, vector<1x8xf32>
    tpu.vector_store %arg3[%c4, %c0_9], %29 {strides = array<i32>} : memref<32x8xf32, #tpu.memory_space<vmem>>, vector<1x8xf32>,
    %c5_i32 = arith.constant 5 : i32
    %31 = arith.addi %0, %c5_i32 : i32
    %32 = arith.index_cast %31 : i32 to index
    %33 = memref.load %arg1[%32] : memref<64xi32, #tpu.memory_space<smem>>
    %34 = arith.index_cast %33 : i32 to index
    %c0_10 = arith.constant 0 : index
    %35 = vector.load %arg2[%34, %c0_10] : memref<4096x8xf32, #tpu.memory_space<vmem>>, vector<1x8xf32>
    %c5 = arith.constant 5 : index
    %c0_11 = arith.constant 0 : index
    %36 = vector.load %arg3[%c5, %c0_11] : memref<32x8xf32, #tpu.memory_space<vmem>>, vector<1x8xf32>
    tpu.vector_store %arg3[%c5, %c0_11], %35 {strides = array<i32>} : memref<32x8xf32, #tpu.memory_space<vmem>>, vector<1x8xf32>,
    %c6_i32 = arith.constant 6 : i32
    %37 = arith.addi %0, %c6_i32 : i32
    %38 = arith.index_cast %37 : i32 to index
    %39 = memref.load %arg1[%38] : memref<64xi32, #tpu.memory_space<smem>>
    %40 = arith.index_cast %39 : i32 to index
    %c0_12 = arith.constant 0 : index
    %41 = vector.load %arg2[%40, %c0_12] : memref<4096x8xf32, #tpu.memory_space<vmem>>, vector<1x8xf32>
    %c6 = arith.constant 6 : index
    %c0_13 = arith.constant 0 : index
    %42 = vector.load %arg3[%c6, %c0_13] : memref<32x8xf32, #tpu.memory_space<vmem>>, vector<1x8xf32>
    tpu.vector_store %arg3[%c6, %c0_13], %41 {strides = array<i32>} : memref<32x8xf32, #tpu.memory_space<vmem>>, vector<1x8xf32>,
    %c7_i32 = arith.constant 7 : i32
    %43 = arith.addi %0, %c7_i32 : i32
    %44 = arith.index_cast %43 : i32 to index
    %45 = memref.load %arg1[%44] : memref<64xi32, #tpu.memory_space<smem>>
    %46 = arith.index_cast %45 : i32 to index
    %c0_14 = arith.constant 0 : index
    %47 = vector.load %arg2[%46, %c0_14] : memref<4096x8xf32, #tpu.memory_space<vmem>>, vector<1x8xf32>
    %c7 = arith.constant 7 : index
    %c0_15 = arith.constant 0 : index
    %48 = vector.load %arg3[%c7, %c0_15] : memref<32x8xf32, #tpu.memory_space<vmem>>, vector<1x8xf32>
    tpu.vector_store %arg3[%c7, %c0_15], %47 {strides = array<i32>} : memref<32x8xf32, #tpu.memory_space<vmem>>, vector<1x8xf32>,
    %c8_i32 = arith.constant 8 : i32
    %49 = arith.addi %0, %c8_i32 : i32
    %50 = arith.index_cast %49 : i32 to index
    %51 = memref.load %arg1[%50] : memref<64xi32, #tpu.memory_space<smem>>
    %52 = arith.index_cast %51 : i32 to index
    %c0_16 = arith.constant 0 : index
    %53 = vector.load %arg2[%52, %c0_16] : memref<4096x8xf32, #tpu.memory_space<vmem>>, vector<1x8xf32>
    %c8 = arith.constant 8 : index
    %c0_17 = arith.constant 0 : index
    %54 = vector.load %arg3[%c8, %c0_17] : memref<32x8xf32, #tpu.memory_space<vmem>>, vector<1x8xf32>
    tpu.vector_store %arg3[%c8, %c0_17], %53 {strides = array<i32>} : memref<32x8xf32, #tpu.memory_space<vmem>>, vector<1x8xf32>,
    %c9_i32 = arith.constant 9 : i32
    %55 = arith.addi %0, %c9_i32 : i32
    %56 = arith.index_cast %55 : i32 to index
    %57 = memref.load %arg1[%56] : memref<64xi32, #tpu.memory_space<smem>>
    %58 = arith.index_cast %57 : i32 to index
    %c0_18 = arith.constant 0 : index
    %59 = vector.load %arg2[%58, %c0_18] : memref<4096x8xf32, #tpu.memory_space<vmem>>, vector<1x8xf32>
    %c9 = arith.constant 9 : index
    %c0_19 = arith.constant 0 : index
    %60 = vector.load %arg3[%c9, %c0_19] : memref<32x8xf32, #tpu.memory_space<vmem>>, vector<1x8xf32>
    tpu.vector_store %arg3[%c9, %c0_19], %59 {strides = array<i32>} : memref<32x8xf32, #tpu.memory_space<vmem>>, vector<1x8xf32>,
    %c10_i32 = arith.constant 10 : i32
    %61 = arith.addi %0, %c10_i32 : i32
    %62 = arith.index_cast %61 : i32 to index
    %63 = memref.load %arg1[%62] : memref<64xi32, #tpu.memory_space<smem>>
    %64 = arith.index_cast %63 : i32 to index
    %c0_20 = arith.constant 0 : index
    %65 = vector.load %arg2[%64, %c0_20] : memref<4096x8xf32, #tpu.memory_space<vmem>>, vector<1x8xf32>
    %c10 = arith.constant 10 : index
    %c0_21 = arith.constant 0 : index
    %66 = vector.load %arg3[%c10, %c0_21] : memref<32x8xf32, #tpu.memory_space<vmem>>, vector<1x8xf32>
    tpu.vector_store %arg3[%c10, %c0_21], %65 {strides = array<i32>} : memref<32x8xf32, #tpu.memory_space<vmem>>, vector<1x8xf32>,
    %c11_i32 = arith.constant 11 : i32
    %67 = arith.addi %0, %c11_i32 : i32
    %68 = arith.index_cast %67 : i32 to index
    %69 = memref.load %arg1[%68] : memref<64xi32, #tpu.memory_space<smem>>
    %70 = arith.index_cast %69 : i32 to index
    %c0_22 = arith.constant 0 : index
    %71 = vector.load %arg2[%70, %c0_22] : memref<4096x8xf32, #tpu.memory_space<vmem>>, vector<1x8xf32>
    %c11 = arith.constant 11 : index
    %c0_23 = arith.constant 0 : index
    %72 = vector.load %arg3[%c11, %c0_23] : memref<32x8xf32, #tpu.memory_space<vmem>>, vector<1x8xf32>
    tpu.vector_store %arg3[%c11, %c0_23], %71 {strides = array<i32>} : memref<32x8xf32, #tpu.memory_space<vmem>>, vector<1x8xf32>,
    %c12_i32 = arith.constant 12 : i32
    %73 = arith.addi %0, %c12_i32 : i32
    %74 = arith.index_cast %73 : i32 to index
    %75 = memref.load %arg1[%74] : memref<64xi32, #tpu.memory_space<smem>>
    %76 = arith.index_cast %75 : i32 to index
    %c0_24 = arith.constant 0 : index
    %77 = vector.load %arg2[%76, %c0_24] : memref<4096x8xf32, #tpu.memory_space<vmem>>, vector<1x8xf32>
    %c12 = arith.constant 12 : index
    %c0_25 = arith.constant 0 : index
    %78 = vector.load %arg3[%c12, %c0_25] : memref<32x8xf32, #tpu.memory_space<vmem>>, vector<1x8xf32>
    tpu.vector_store %arg3[%c12, %c0_25], %77 {strides = array<i32>} : memref<32x8xf32, #tpu.memory_space<vmem>>, vector<1x8xf32>,
    %c13_i32 = arith.constant 13 : i32
    %79 = arith.addi %0, %c13_i32 : i32
    %80 = arith.index_cast %79 : i32 to index
    %81 = memref.load %arg1[%80] : memref<64xi32, #tpu.memory_space<smem>>
    %82 = arith.index_cast %81 : i32 to index
    %c0_26 = arith.constant 0 : index
    %83 = vector.load %arg2[%82, %c0_26] : memref<4096x8xf32, #tpu.memory_space<vmem>>, vector<1x8xf32>
    %c13 = arith.constant 13 : index
    %c0_27 = arith.constant 0 : index
    %84 = vector.load %arg3[%c13, %c0_27] : memref<32x8xf32, #tpu.memory_space<vmem>>, vector<1x8xf32>
    tpu.vector_store %arg3[%c13, %c0_27], %83 {strides = array<i32>} : memref<32x8xf32, #tpu.memory_space<vmem>>, vector<1x8xf32>,
    %c14_i32 = arith.constant 14 : i32
    %85 = arith.addi %0, %c14_i32 : i32
    %86 = arith.index_cast %85 : i32 to index
    %87 = memref.load %arg1[%86] : memref<64xi32, #tpu.memory_space<smem>>
    %88 = arith.index_cast %87 : i32 to index
    %c0_28 = arith.constant 0 : index
    %89 = vector.load %arg2[%88, %c0_28] : memref<4096x8xf32, #tpu.memory_space<vmem>>, vector<1x8xf32>
    %c14 = arith.constant 14 : index
    %c0_29 = arith.constant 0 : index
    %90 = vector.load %arg3[%c14, %c0_29] : memref<32x8xf32, #tpu.memory_space<vmem>>, vector<1x8xf32>
    tpu.vector_store %arg3[%c14, %c0_29], %89 {strides = array<i32>} : memref<32x8xf32, #tpu.memory_space<vmem>>, vector<1x8xf32>,
    %c15_i32 = arith.constant 15 : i32
    %91 = arith.addi %0, %c15_i32 : i32
    %92 = arith.index_cast %91 : i32 to index
    %93 = memref.load %arg1[%92] : memref<64xi32, #tpu.memory_space<smem>>
    %94 = arith.index_cast %93 : i32 to index
    %c0_30 = arith.constant 0 : index
    %95 = vector.load %arg2[%94, %c0_30] : memref<4096x8xf32, #tpu.memory_space<vmem>>, vector<1x8xf32>
    %c15 = arith.constant 15 : index
    %c0_31 = arith.constant 0 : index
    %96 = vector.load %arg3[%c15, %c0_31] : memref<32x8xf32, #tpu.memory_space<vmem>>, vector<1x8xf32>
    tpu.vector_store %arg3[%c15, %c0_31], %95 {strides = array<i32>} : memref<32x8xf32, #tpu.memory_space<vmem>>, vector<1x8xf32>,
    %c16_i32 = arith.constant 16 : i32
    %97 = arith.addi %0, %c16_i32 : i32
    %98 = arith.index_cast %97 : i32 to index
    %99 = memref.load %arg1[%98] : memref<64xi32, #tpu.memory_space<smem>>
    %100 = arith.index_cast %99 : i32 to index
    %c0_32 = arith.constant 0 : index
    %101 = vector.load %arg2[%100, %c0_32] : memref<4096x8xf32, #tpu.memory_space<vmem>>, vector<1x8xf32>
    %c16 = arith.constant 16 : index
    %c0_33 = arith.constant 0 : index
    %102 = vector.load %arg3[%c16, %c0_33] : memref<32x8xf32, #tpu.memory_space<vmem>>, vector<1x8xf32>
    tpu.vector_store %arg3[%c16, %c0_33], %101 {strides = array<i32>} : memref<32x8xf32, #tpu.memory_space<vmem>>, vector<1x8xf32>,
    %c17_i32 = arith.constant 17 : i32
    %103 = arith.addi %0, %c17_i32 : i32
    %104 = arith.index_cast %103 : i32 to index
    %105 = memref.load %arg1[%104] : memref<64xi32, #tpu.memory_space<smem>>
    %106 = arith.index_cast %105 : i32 to index
    %c0_34 = arith.constant 0 : index
    %107 = vector.load %arg2[%106, %c0_34] : memref<4096x8xf32, #tpu.memory_space<vmem>>, vector<1x8xf32>
    %c17 = arith.constant 17 : index
    %c0_35 = arith.constant 0 : index
    %108 = vector.load %arg3[%c17, %c0_35] : memref<32x8xf32, #tpu.memory_space<vmem>>, vector<1x8xf32>
    tpu.vector_store %arg3[%c17, %c0_35], %107 {strides = array<i32>} : memref<32x8xf32, #tpu.memory_space<vmem>>, vector<1x8xf32>,
    %c18_i32 = arith.constant 18 : i32
    %109 = arith.addi %0, %c18_i32 : i32
    %110 = arith.index_cast %109 : i32 to index
    %111 = memref.load %arg1[%110] : memref<64xi32, #tpu.memory_space<smem>>
    %112 = arith.index_cast %111 : i32 to index
    %c0_36 = arith.constant 0 : index
    %113 = vector.load %arg2[%112, %c0_36] : memref<4096x8xf32, #tpu.memory_space<vmem>>, vector<1x8xf32>
    %c18 = arith.constant 18 : index
    %c0_37 = arith.constant 0 : index
    %114 = vector.load %arg3[%c18, %c0_37] : memref<32x8xf32, #tpu.memory_space<vmem>>, vector<1x8xf32>
    tpu.vector_store %arg3[%c18, %c0_37], %113 {strides = array<i32>} : memref<32x8xf32, #tpu.memory_space<vmem>>, vector<1x8xf32>,
    %c19_i32 = arith.constant 19 : i32
    %115 = arith.addi %0, %c19_i32 : i32
    %116 = arith.index_cast %115 : i32 to index
    %117 = memref.load %arg1[%116] : memref<64xi32, #tpu.memory_space<smem>>
    %118 = arith.index_cast %117 : i32 to index
    %c0_38 = arith.constant 0 : index
    %119 = vector.load %arg2[%118, %c0_38] : memref<4096x8xf32, #tpu.memory_space<vmem>>, vector<1x8xf32>
    %c19 = arith.constant 19 : index
    %c0_39 = arith.constant 0 : index
    %120 = vector.load %arg3[%c19, %c0_39] : memref<32x8xf32, #tpu.memory_space<vmem>>, vector<1x8xf32>
    tpu.vector_store %arg3[%c19, %c0_39], %119 {strides = array<i32>} : memref<32x8xf32, #tpu.memory_space<vmem>>, vector<1x8xf32>,
    %c20_i32 = arith.constant 20 : i32
    %121 = arith.addi %0, %c20_i32 : i32
    %122 = arith.index_cast %121 : i32 to index
    %123 = memref.load %arg1[%122] : memref<64xi32, #tpu.memory_space<smem>>
    %124 = arith.index_cast %123 : i32 to index
    %c0_40 = arith.constant 0 : index
    %125 = vector.load %arg2[%124, %c0_40] : memref<4096x8xf32, #tpu.memory_space<vmem>>, vector<1x8xf32>
    %c20 = arith.constant 20 : index
    %c0_41 = arith.constant 0 : index
    %126 = vector.load %arg3[%c20, %c0_41] : memref<32x8xf32, #tpu.memory_space<vmem>>, vector<1x8xf32>
    tpu.vector_store %arg3[%c20, %c0_41], %125 {strides = array<i32>} : memref<32x8xf32, #tpu.memory_space<vmem>>, vector<1x8xf32>,
    %c21_i32 = arith.constant 21 : i32
    %127 = arith.addi %0, %c21_i32 : i32
    %128 = arith.index_cast %127 : i32 to index
    %129 = memref.load %arg1[%128] : memref<64xi32, #tpu.memory_space<smem>>
    %130 = arith.index_cast %129 : i32 to index
    %c0_42 = arith.constant 0 : index
    %131 = vector.load %arg2[%130, %c0_42] : memref<4096x8xf32, #tpu.memory_space<vmem>>, vector<1x8xf32>
    %c21 = arith.constant 21 : index
    %c0_43 = arith.constant 0 : index
    %132 = vector.load %arg3[%c21, %c0_43] : memref<32x8xf32, #tpu.memory_space<vmem>>, vector<1x8xf32>
    tpu.vector_store %arg3[%c21, %c0_43], %131 {strides = array<i32>} : memref<32x8xf32, #tpu.memory_space<vmem>>, vector<1x8xf32>,
    %c22_i32 = arith.constant 22 : i32
    %133 = arith.addi %0, %c22_i32 : i32
    %134 = arith.index_cast %133 : i32 to index
    %135 = memref.load %arg1[%134] : memref<64xi32, #tpu.memory_space<smem>>
    %136 = arith.index_cast %135 : i32 to index
    %c0_44 = arith.constant 0 : index
    %137 = vector.load %arg2[%136, %c0_44] : memref<4096x8xf32, #tpu.memory_space<vmem>>, vector<1x8xf32>
    %c22 = arith.constant 22 : index
    %c0_45 = arith.constant 0 : index
    %138 = vector.load %arg3[%c22, %c0_45] : memref<32x8xf32, #tpu.memory_space<vmem>>, vector<1x8xf32>
    tpu.vector_store %arg3[%c22, %c0_45], %137 {strides = array<i32>} : memref<32x8xf32, #tpu.memory_space<vmem>>, vector<1x8xf32>,
    %c23_i32 = arith.constant 23 : i32
    %139 = arith.addi %0, %c23_i32 : i32
    %140 = arith.index_cast %139 : i32 to index
    %141 = memref.load %arg1[%140] : memref<64xi32, #tpu.memory_space<smem>>
    %142 = arith.index_cast %141 : i32 to index
    %c0_46 = arith.constant 0 : index
    %143 = vector.load %arg2[%142, %c0_46] : memref<4096x8xf32, #tpu.memory_space<vmem>>, vector<1x8xf32>
    %c23 = arith.constant 23 : index
    %c0_47 = arith.constant 0 : index
    %144 = vector.load %arg3[%c23, %c0_47] : memref<32x8xf32, #tpu.memory_space<vmem>>, vector<1x8xf32>
    tpu.vector_store %arg3[%c23, %c0_47], %143 {strides = array<i32>} : memref<32x8xf32, #tpu.memory_space<vmem>>, vector<1x8xf32>,
    %c24_i32 = arith.constant 24 : i32
    %145 = arith.addi %0, %c24_i32 : i32
    %146 = arith.index_cast %145 : i32 to index
    %147 = memref.load %arg1[%146] : memref<64xi32, #tpu.memory_space<smem>>
    %148 = arith.index_cast %147 : i32 to index
    %c0_48 = arith.constant 0 : index
    %149 = vector.load %arg2[%148, %c0_48] : memref<4096x8xf32, #tpu.memory_space<vmem>>, vector<1x8xf32>
    %c24 = arith.constant 24 : index
    %c0_49 = arith.constant 0 : index
    %150 = vector.load %arg3[%c24, %c0_49] : memref<32x8xf32, #tpu.memory_space<vmem>>, vector<1x8xf32>
    tpu.vector_store %arg3[%c24, %c0_49], %149 {strides = array<i32>} : memref<32x8xf32, #tpu.memory_space<vmem>>, vector<1x8xf32>,
    %c25_i32 = arith.constant 25 : i32
    %151 = arith.addi %0, %c25_i32 : i32
    %152 = arith.index_cast %151 : i32 to index
    %153 = memref.load %arg1[%152] : memref<64xi32, #tpu.memory_space<smem>>
    %154 = arith.index_cast %153 : i32 to index
    %c0_50 = arith.constant 0 : index
    %155 = vector.load %arg2[%154, %c0_50] : memref<4096x8xf32, #tpu.memory_space<vmem>>, vector<1x8xf32>
    %c25 = arith.constant 25 : index
    %c0_51 = arith.constant 0 : index
    %156 = vector.load %arg3[%c25, %c0_51] : memref<32x8xf32, #tpu.memory_space<vmem>>, vector<1x8xf32>
    tpu.vector_store %arg3[%c25, %c0_51], %155 {strides = array<i32>} : memref<32x8xf32, #tpu.memory_space<vmem>>, vector<1x8xf32>,
    %c26_i32 = arith.constant 26 : i32
    %157 = arith.addi %0, %c26_i32 : i32
    %158 = arith.index_cast %157 : i32 to index
    %159 = memref.load %arg1[%158] : memref<64xi32, #tpu.memory_space<smem>>
    %160 = arith.index_cast %159 : i32 to index
    %c0_52 = arith.constant 0 : index
    %161 = vector.load %arg2[%160, %c0_52] : memref<4096x8xf32, #tpu.memory_space<vmem>>, vector<1x8xf32>
    %c26 = arith.constant 26 : index
    %c0_53 = arith.constant 0 : index
    %162 = vector.load %arg3[%c26, %c0_53] : memref<32x8xf32, #tpu.memory_space<vmem>>, vector<1x8xf32>
    tpu.vector_store %arg3[%c26, %c0_53], %161 {strides = array<i32>} : memref<32x8xf32, #tpu.memory_space<vmem>>, vector<1x8xf32>,
    %c27_i32 = arith.constant 27 : i32
    %163 = arith.addi %0, %c27_i32 : i32
    %164 = arith.index_cast %163 : i32 to index
    %165 = memref.load %arg1[%164] : memref<64xi32, #tpu.memory_space<smem>>
    %166 = arith.index_cast %165 : i32 to index
    %c0_54 = arith.constant 0 : index
    %167 = vector.load %arg2[%166, %c0_54] : memref<4096x8xf32, #tpu.memory_space<vmem>>, vector<1x8xf32>
    %c27 = arith.constant 27 : index
    %c0_55 = arith.constant 0 : index
    %168 = vector.load %arg3[%c27, %c0_55] : memref<32x8xf32, #tpu.memory_space<vmem>>, vector<1x8xf32>
    tpu.vector_store %arg3[%c27, %c0_55], %167 {strides = array<i32>} : memref<32x8xf32, #tpu.memory_space<vmem>>, vector<1x8xf32>,
    %c28_i32 = arith.constant 28 : i32
    %169 = arith.addi %0, %c28_i32 : i32
    %170 = arith.index_cast %169 : i32 to index
    %171 = memref.load %arg1[%170] : memref<64xi32, #tpu.memory_space<smem>>
    %172 = arith.index_cast %171 : i32 to index
    %c0_56 = arith.constant 0 : index
    %173 = vector.load %arg2[%172, %c0_56] : memref<4096x8xf32, #tpu.memory_space<vmem>>, vector<1x8xf32>
    %c28 = arith.constant 28 : index
    %c0_57 = arith.constant 0 : index
    %174 = vector.load %arg3[%c28, %c0_57] : memref<32x8xf32, #tpu.memory_space<vmem>>, vector<1x8xf32>
    tpu.vector_store %arg3[%c28, %c0_57], %173 {strides = array<i32>} : memref<32x8xf32, #tpu.memory_space<vmem>>, vector<1x8xf32>,
    %c29_i32 = arith.constant 29 : i32
    %175 = arith.addi %0, %c29_i32 : i32
    %176 = arith.index_cast %175 : i32 to index
    %177 = memref.load %arg1[%176] : memref<64xi32, #tpu.memory_space<smem>>
    %178 = arith.index_cast %177 : i32 to index
    %c0_58 = arith.constant 0 : index
    %179 = vector.load %arg2[%178, %c0_58] : memref<4096x8xf32, #tpu.memory_space<vmem>>, vector<1x8xf32>
    %c29 = arith.constant 29 : index
    %c0_59 = arith.constant 0 : index
    %180 = vector.load %arg3[%c29, %c0_59] : memref<32x8xf32, #tpu.memory_space<vmem>>, vector<1x8xf32>
    tpu.vector_store %arg3[%c29, %c0_59], %179 {strides = array<i32>} : memref<32x8xf32, #tpu.memory_space<vmem>>, vector<1x8xf32>,
    %c30_i32 = arith.constant 30 : i32
    %181 = arith.addi %0, %c30_i32 : i32
    %182 = arith.index_cast %181 : i32 to index
    %183 = memref.load %arg1[%182] : memref<64xi32, #tpu.memory_space<smem>>
    %184 = arith.index_cast %183 : i32 to index
    %c0_60 = arith.constant 0 : index
    %185 = vector.load %arg2[%184, %c0_60] : memref<4096x8xf32, #tpu.memory_space<vmem>>, vector<1x8xf32>
    %c30 = arith.constant 30 : index
    %c0_61 = arith.constant 0 : index
    %186 = vector.load %arg3[%c30, %c0_61] : memref<32x8xf32, #tpu.memory_space<vmem>>, vector<1x8xf32>
    tpu.vector_store %arg3[%c30, %c0_61], %185 {strides = array<i32>} : memref<32x8xf32, #tpu.memory_space<vmem>>, vector<1x8xf32>,
    %c31_i32 = arith.constant 31 : i32
    %187 = arith.addi %0, %c31_i32 : i32
    %188 = arith.index_cast %187 : i32 to index
    %189 = memref.load %arg1[%188] : memref<64xi32, #tpu.memory_space<smem>>
    %190 = arith.index_cast %189 : i32 to index
    %c0_62 = arith.constant 0 : index
    %191 = vector.load %arg2[%190, %c0_62] : memref<4096x8xf32, #tpu.memory_space<vmem>>, vector<1x8xf32>
    %c31 = arith.constant 31 : index
    %c0_63 = arith.constant 0 : index
    %192 = vector.load %arg3[%c31, %c0_63] : memref<32x8xf32, #tpu.memory_space<vmem>>, vector<1x8xf32>
    tpu.vector_store %arg3[%c31, %c0_63], %191 {strides = array<i32>} : memref<32x8xf32, #tpu.memory_space<vmem>>, vector<1x8xf32>,
    %c0_64 = arith.constant 0 : index
    %c0_65 = arith.constant 0 : index
    %193 = vector.load %arg3[%c0_64, %c0_65] : memref<32x8xf32, #tpu.memory_space<vmem>>, vector<32x8xf32>
    %194 = arith.mulf %193, %193 : vector<32x8xf32>
    %cst = arith.constant dense<0.000000e+00> : vector<32xf32>
    %195 = vector.multi_reduction <add>, %194, %cst [1] : vector<32x8xf32> to vector<32xf32>
    %196 = vector.shape_cast %195 : vector<32xf32> to vector<32x1xf32>
    %197 = math.sqrt %196 : vector<32x1xf32>
    %cst_66 = arith.constant 1.000000e-07 : f32
    %198 = vector.broadcast %cst_66 : f32 to vector<32x1xf32>
    %199 = arith.addf %197, %198 : vector<32x1xf32>
    %200 = tpu.reciprocal %199 : vector<32x1xf32> -> vector<32x1xf32>
    %201 = vector.broadcast %200 : vector<32x1xf32> to vector<32x8xf32>
    %202 = arith.mulf %193, %201 : vector<32x8xf32>
    %c0_67 = arith.constant 0 : index
    %c0_68 = arith.constant 0 : index
    %203 = vector.load %arg3[%c0_67, %c0_68] : memref<32x8xf32, #tpu.memory_space<vmem>>, vector<32x8xf32>
    tpu.vector_store %arg3[%c0_67, %c0_68], %202 {strides = array<i32>} : memref<32x8xf32, #tpu.memory_space<vmem>>, vector<32x8xf32>,
    return
  }
  func.func @transform_0(%arg0: i32, %arg1: memref<64xi32, #tpu.memory_space<smem>>) -> (i32, i32) {
    %c0_i32 = arith.constant 0 : i32
    %c0_i32_0 = arith.constant 0 : i32
    %c0_i32_1 = arith.constant 0 : i32
    return %c0_i32, %c0_i32_0 : i32, i32
  }
  func.func @transform_1(%arg0: i32, %arg1: memref<64xi32, #tpu.memory_space<smem>>) -> (i32, i32) {
    %c0_i32 = arith.constant 0 : i32
    %c0_i32_0 = arith.constant 0 : i32
    return %arg0, %c0_i32 : i32, i32
  }
}

module attributes {stable_mosaic.version = 11 : i64} {
  func.func @_gather_l2norm_kernel(%arg0: i32, %arg1: memref<64xi32, #tpu.memory_space<smem>>, %arg2: memref<1024x32xf32, #tpu.memory_space<vmem>>, %arg3: memref<32x32xf32, #tpu.memory_space<vmem>>) attributes {dimension_semantics = [#tpu.dimension_semantics<parallel>], iteration_bounds = array<i64: 2>, scalar_prefetch = 1 : i64, scratch_operands = 0 : i64, tpu.core_type = #tpu.core_type<tc>, window_params = [{pipeline_mode = #tpu.pipeline_mode<synchronous>, transform_indices = @transform_0, window_bounds = array<i64: 1024, 32>}, {transform_indices = @transform_1, window_bounds = array<i64: 32, 32>}]} {
    %c32_i32 = arith.constant 32 : i32
    %0 = arith.muli %arg0, %c32_i32 : i32
    %c0_i32 = arith.constant 0 : i32
    %1 = arith.addi %0, %c0_i32 : i32
    %2 = arith.index_cast %1 : i32 to index
    %3 = memref.load %arg1[%2] : memref<64xi32, #tpu.memory_space<smem>>
    %4 = arith.index_cast %3 : i32 to index
    %c0 = arith.constant 0 : index
    %5 = vector.load %arg2[%4, %c0] : memref<1024x32xf32, #tpu.memory_space<vmem>>, vector<1x32xf32>
    %c0_0 = arith.constant 0 : index
    %c0_1 = arith.constant 0 : index
    %6 = vector.load %arg3[%c0_0, %c0_1] : memref<32x32xf32, #tpu.memory_space<vmem>>, vector<1x32xf32>
    tpu.vector_store %arg3[%c0_0, %c0_1], %5 {strides = array<i32>} : memref<32x32xf32, #tpu.memory_space<vmem>>, vector<1x32xf32>,
    %c1_i32 = arith.constant 1 : i32
    %7 = arith.addi %0, %c1_i32 : i32
    %8 = arith.index_cast %7 : i32 to index
    %9 = memref.load %arg1[%8] : memref<64xi32, #tpu.memory_space<smem>>
    %10 = arith.index_cast %9 : i32 to index
    %c0_2 = arith.constant 0 : index
    %11 = vector.load %arg2[%10, %c0_2] : memref<1024x32xf32, #tpu.memory_space<vmem>>, vector<1x32xf32>
    %c1 = arith.constant 1 : index
    %c0_3 = arith.constant 0 : index
    %12 = vector.load %arg3[%c1, %c0_3] : memref<32x32xf32, #tpu.memory_space<vmem>>, vector<1x32xf32>
    tpu.vector_store %arg3[%c1, %c0_3], %11 {strides = array<i32>} : memref<32x32xf32, #tpu.memory_space<vmem>>, vector<1x32xf32>,
    %c2_i32 = arith.constant 2 : i32
    %13 = arith.addi %0, %c2_i32 : i32
    %14 = arith.index_cast %13 : i32 to index
    %15 = memref.load %arg1[%14] : memref<64xi32, #tpu.memory_space<smem>>
    %16 = arith.index_cast %15 : i32 to index
    %c0_4 = arith.constant 0 : index
    %17 = vector.load %arg2[%16, %c0_4] : memref<1024x32xf32, #tpu.memory_space<vmem>>, vector<1x32xf32>
    %c2 = arith.constant 2 : index
    %c0_5 = arith.constant 0 : index
    %18 = vector.load %arg3[%c2, %c0_5] : memref<32x32xf32, #tpu.memory_space<vmem>>, vector<1x32xf32>
    tpu.vector_store %arg3[%c2, %c0_5], %17 {strides = array<i32>} : memref<32x32xf32, #tpu.memory_space<vmem>>, vector<1x32xf32>,
    %c3_i32 = arith.constant 3 : i32
    %19 = arith.addi %0, %c3_i32 : i32
    %20 = arith.index_cast %19 : i32 to index
    %21 = memref.load %arg1[%20] : memref<64xi32, #tpu.memory_space<smem>>
    %22 = arith.index_cast %21 : i32 to index
    %c0_6 = arith.constant 0 : index
    %23 = vector.load %arg2[%22, %c0_6] : memref<1024x32xf32, #tpu.memory_space<vmem>>, vector<1x32xf32>
    %c3 = arith.constant 3 : index
    %c0_7 = arith.constant 0 : index
    %24 = vector.load %arg3[%c3, %c0_7] : memref<32x32xf32, #tpu.memory_space<vmem>>, vector<1x32xf32>
    tpu.vector_store %arg3[%c3, %c0_7], %23 {strides = array<i32>} : memref<32x32xf32, #tpu.memory_space<vmem>>, vector<1x32xf32>,
    %c4_i32 = arith.constant 4 : i32
    %25 = arith.addi %0, %c4_i32 : i32
    %26 = arith.index_cast %25 : i32 to index
    %27 = memref.load %arg1[%26] : memref<64xi32, #tpu.memory_space<smem>>
    %28 = arith.index_cast %27 : i32 to index
    %c0_8 = arith.constant 0 : index
    %29 = vector.load %arg2[%28, %c0_8] : memref<1024x32xf32, #tpu.memory_space<vmem>>, vector<1x32xf32>
    %c4 = arith.constant 4 : index
    %c0_9 = arith.constant 0 : index
    %30 = vector.load %arg3[%c4, %c0_9] : memref<32x32xf32, #tpu.memory_space<vmem>>, vector<1x32xf32>
    tpu.vector_store %arg3[%c4, %c0_9], %29 {strides = array<i32>} : memref<32x32xf32, #tpu.memory_space<vmem>>, vector<1x32xf32>,
    %c5_i32 = arith.constant 5 : i32
    %31 = arith.addi %0, %c5_i32 : i32
    %32 = arith.index_cast %31 : i32 to index
    %33 = memref.load %arg1[%32] : memref<64xi32, #tpu.memory_space<smem>>
    %34 = arith.index_cast %33 : i32 to index
    %c0_10 = arith.constant 0 : index
    %35 = vector.load %arg2[%34, %c0_10] : memref<1024x32xf32, #tpu.memory_space<vmem>>, vector<1x32xf32>
    %c5 = arith.constant 5 : index
    %c0_11 = arith.constant 0 : index
    %36 = vector.load %arg3[%c5, %c0_11] : memref<32x32xf32, #tpu.memory_space<vmem>>, vector<1x32xf32>
    tpu.vector_store %arg3[%c5, %c0_11], %35 {strides = array<i32>} : memref<32x32xf32, #tpu.memory_space<vmem>>, vector<1x32xf32>,
    %c6_i32 = arith.constant 6 : i32
    %37 = arith.addi %0, %c6_i32 : i32
    %38 = arith.index_cast %37 : i32 to index
    %39 = memref.load %arg1[%38] : memref<64xi32, #tpu.memory_space<smem>>
    %40 = arith.index_cast %39 : i32 to index
    %c0_12 = arith.constant 0 : index
    %41 = vector.load %arg2[%40, %c0_12] : memref<1024x32xf32, #tpu.memory_space<vmem>>, vector<1x32xf32>
    %c6 = arith.constant 6 : index
    %c0_13 = arith.constant 0 : index
    %42 = vector.load %arg3[%c6, %c0_13] : memref<32x32xf32, #tpu.memory_space<vmem>>, vector<1x32xf32>
    tpu.vector_store %arg3[%c6, %c0_13], %41 {strides = array<i32>} : memref<32x32xf32, #tpu.memory_space<vmem>>, vector<1x32xf32>,
    %c7_i32 = arith.constant 7 : i32
    %43 = arith.addi %0, %c7_i32 : i32
    %44 = arith.index_cast %43 : i32 to index
    %45 = memref.load %arg1[%44] : memref<64xi32, #tpu.memory_space<smem>>
    %46 = arith.index_cast %45 : i32 to index
    %c0_14 = arith.constant 0 : index
    %47 = vector.load %arg2[%46, %c0_14] : memref<1024x32xf32, #tpu.memory_space<vmem>>, vector<1x32xf32>
    %c7 = arith.constant 7 : index
    %c0_15 = arith.constant 0 : index
    %48 = vector.load %arg3[%c7, %c0_15] : memref<32x32xf32, #tpu.memory_space<vmem>>, vector<1x32xf32>
    tpu.vector_store %arg3[%c7, %c0_15], %47 {strides = array<i32>} : memref<32x32xf32, #tpu.memory_space<vmem>>, vector<1x32xf32>,
    %c8_i32 = arith.constant 8 : i32
    %49 = arith.addi %0, %c8_i32 : i32
    %50 = arith.index_cast %49 : i32 to index
    %51 = memref.load %arg1[%50] : memref<64xi32, #tpu.memory_space<smem>>
    %52 = arith.index_cast %51 : i32 to index
    %c0_16 = arith.constant 0 : index
    %53 = vector.load %arg2[%52, %c0_16] : memref<1024x32xf32, #tpu.memory_space<vmem>>, vector<1x32xf32>
    %c8 = arith.constant 8 : index
    %c0_17 = arith.constant 0 : index
    %54 = vector.load %arg3[%c8, %c0_17] : memref<32x32xf32, #tpu.memory_space<vmem>>, vector<1x32xf32>
    tpu.vector_store %arg3[%c8, %c0_17], %53 {strides = array<i32>} : memref<32x32xf32, #tpu.memory_space<vmem>>, vector<1x32xf32>,
    %c9_i32 = arith.constant 9 : i32
    %55 = arith.addi %0, %c9_i32 : i32
    %56 = arith.index_cast %55 : i32 to index
    %57 = memref.load %arg1[%56] : memref<64xi32, #tpu.memory_space<smem>>
    %58 = arith.index_cast %57 : i32 to index
    %c0_18 = arith.constant 0 : index
    %59 = vector.load %arg2[%58, %c0_18] : memref<1024x32xf32, #tpu.memory_space<vmem>>, vector<1x32xf32>
    %c9 = arith.constant 9 : index
    %c0_19 = arith.constant 0 : index
    %60 = vector.load %arg3[%c9, %c0_19] : memref<32x32xf32, #tpu.memory_space<vmem>>, vector<1x32xf32>
    tpu.vector_store %arg3[%c9, %c0_19], %59 {strides = array<i32>} : memref<32x32xf32, #tpu.memory_space<vmem>>, vector<1x32xf32>,
    %c10_i32 = arith.constant 10 : i32
    %61 = arith.addi %0, %c10_i32 : i32
    %62 = arith.index_cast %61 : i32 to index
    %63 = memref.load %arg1[%62] : memref<64xi32, #tpu.memory_space<smem>>
    %64 = arith.index_cast %63 : i32 to index
    %c0_20 = arith.constant 0 : index
    %65 = vector.load %arg2[%64, %c0_20] : memref<1024x32xf32, #tpu.memory_space<vmem>>, vector<1x32xf32>
    %c10 = arith.constant 10 : index
    %c0_21 = arith.constant 0 : index
    %66 = vector.load %arg3[%c10, %c0_21] : memref<32x32xf32, #tpu.memory_space<vmem>>, vector<1x32xf32>
    tpu.vector_store %arg3[%c10, %c0_21], %65 {strides = array<i32>} : memref<32x32xf32, #tpu.memory_space<vmem>>, vector<1x32xf32>,
    %c11_i32 = arith.constant 11 : i32
    %67 = arith.addi %0, %c11_i32 : i32
    %68 = arith.index_cast %67 : i32 to index
    %69 = memref.load %arg1[%68] : memref<64xi32, #tpu.memory_space<smem>>
    %70 = arith.index_cast %69 : i32 to index
    %c0_22 = arith.constant 0 : index
    %71 = vector.load %arg2[%70, %c0_22] : memref<1024x32xf32, #tpu.memory_space<vmem>>, vector<1x32xf32>
    %c11 = arith.constant 11 : index
    %c0_23 = arith.constant 0 : index
    %72 = vector.load %arg3[%c11, %c0_23] : memref<32x32xf32, #tpu.memory_space<vmem>>, vector<1x32xf32>
    tpu.vector_store %arg3[%c11, %c0_23], %71 {strides = array<i32>} : memref<32x32xf32, #tpu.memory_space<vmem>>, vector<1x32xf32>,
    %c12_i32 = arith.constant 12 : i32
    %73 = arith.addi %0, %c12_i32 : i32
    %74 = arith.index_cast %73 : i32 to index
    %75 = memref.load %arg1[%74] : memref<64xi32, #tpu.memory_space<smem>>
    %76 = arith.index_cast %75 : i32 to index
    %c0_24 = arith.constant 0 : index
    %77 = vector.load %arg2[%76, %c0_24] : memref<1024x32xf32, #tpu.memory_space<vmem>>, vector<1x32xf32>
    %c12 = arith.constant 12 : index
    %c0_25 = arith.constant 0 : index
    %78 = vector.load %arg3[%c12, %c0_25] : memref<32x32xf32, #tpu.memory_space<vmem>>, vector<1x32xf32>
    tpu.vector_store %arg3[%c12, %c0_25], %77 {strides = array<i32>} : memref<32x32xf32, #tpu.memory_space<vmem>>, vector<1x32xf32>,
    %c13_i32 = arith.constant 13 : i32
    %79 = arith.addi %0, %c13_i32 : i32
    %80 = arith.index_cast %79 : i32 to index
    %81 = memref.load %arg1[%80] : memref<64xi32, #tpu.memory_space<smem>>
    %82 = arith.index_cast %81 : i32 to index
    %c0_26 = arith.constant 0 : index
    %83 = vector.load %arg2[%82, %c0_26] : memref<1024x32xf32, #tpu.memory_space<vmem>>, vector<1x32xf32>
    %c13 = arith.constant 13 : index
    %c0_27 = arith.constant 0 : index
    %84 = vector.load %arg3[%c13, %c0_27] : memref<32x32xf32, #tpu.memory_space<vmem>>, vector<1x32xf32>
    tpu.vector_store %arg3[%c13, %c0_27], %83 {strides = array<i32>} : memref<32x32xf32, #tpu.memory_space<vmem>>, vector<1x32xf32>,
    %c14_i32 = arith.constant 14 : i32
    %85 = arith.addi %0, %c14_i32 : i32
    %86 = arith.index_cast %85 : i32 to index
    %87 = memref.load %arg1[%86] : memref<64xi32, #tpu.memory_space<smem>>
    %88 = arith.index_cast %87 : i32 to index
    %c0_28 = arith.constant 0 : index
    %89 = vector.load %arg2[%88, %c0_28] : memref<1024x32xf32, #tpu.memory_space<vmem>>, vector<1x32xf32>
    %c14 = arith.constant 14 : index
    %c0_29 = arith.constant 0 : index
    %90 = vector.load %arg3[%c14, %c0_29] : memref<32x32xf32, #tpu.memory_space<vmem>>, vector<1x32xf32>
    tpu.vector_store %arg3[%c14, %c0_29], %89 {strides = array<i32>} : memref<32x32xf32, #tpu.memory_space<vmem>>, vector<1x32xf32>,
    %c15_i32 = arith.constant 15 : i32
    %91 = arith.addi %0, %c15_i32 : i32
    %92 = arith.index_cast %91 : i32 to index
    %93 = memref.load %arg1[%92] : memref<64xi32, #tpu.memory_space<smem>>
    %94 = arith.index_cast %93 : i32 to index
    %c0_30 = arith.constant 0 : index
    %95 = vector.load %arg2[%94, %c0_30] : memref<1024x32xf32, #tpu.memory_space<vmem>>, vector<1x32xf32>
    %c15 = arith.constant 15 : index
    %c0_31 = arith.constant 0 : index
    %96 = vector.load %arg3[%c15, %c0_31] : memref<32x32xf32, #tpu.memory_space<vmem>>, vector<1x32xf32>
    tpu.vector_store %arg3[%c15, %c0_31], %95 {strides = array<i32>} : memref<32x32xf32, #tpu.memory_space<vmem>>, vector<1x32xf32>,
    %c16_i32 = arith.constant 16 : i32
    %97 = arith.addi %0, %c16_i32 : i32
    %98 = arith.index_cast %97 : i32 to index
    %99 = memref.load %arg1[%98] : memref<64xi32, #tpu.memory_space<smem>>
    %100 = arith.index_cast %99 : i32 to index
    %c0_32 = arith.constant 0 : index
    %101 = vector.load %arg2[%100, %c0_32] : memref<1024x32xf32, #tpu.memory_space<vmem>>, vector<1x32xf32>
    %c16 = arith.constant 16 : index
    %c0_33 = arith.constant 0 : index
    %102 = vector.load %arg3[%c16, %c0_33] : memref<32x32xf32, #tpu.memory_space<vmem>>, vector<1x32xf32>
    tpu.vector_store %arg3[%c16, %c0_33], %101 {strides = array<i32>} : memref<32x32xf32, #tpu.memory_space<vmem>>, vector<1x32xf32>,
    %c17_i32 = arith.constant 17 : i32
    %103 = arith.addi %0, %c17_i32 : i32
    %104 = arith.index_cast %103 : i32 to index
    %105 = memref.load %arg1[%104] : memref<64xi32, #tpu.memory_space<smem>>
    %106 = arith.index_cast %105 : i32 to index
    %c0_34 = arith.constant 0 : index
    %107 = vector.load %arg2[%106, %c0_34] : memref<1024x32xf32, #tpu.memory_space<vmem>>, vector<1x32xf32>
    %c17 = arith.constant 17 : index
    %c0_35 = arith.constant 0 : index
    %108 = vector.load %arg3[%c17, %c0_35] : memref<32x32xf32, #tpu.memory_space<vmem>>, vector<1x32xf32>
    tpu.vector_store %arg3[%c17, %c0_35], %107 {strides = array<i32>} : memref<32x32xf32, #tpu.memory_space<vmem>>, vector<1x32xf32>,
    %c18_i32 = arith.constant 18 : i32
    %109 = arith.addi %0, %c18_i32 : i32
    %110 = arith.index_cast %109 : i32 to index
    %111 = memref.load %arg1[%110] : memref<64xi32, #tpu.memory_space<smem>>
    %112 = arith.index_cast %111 : i32 to index
    %c0_36 = arith.constant 0 : index
    %113 = vector.load %arg2[%112, %c0_36] : memref<1024x32xf32, #tpu.memory_space<vmem>>, vector<1x32xf32>
    %c18 = arith.constant 18 : index
    %c0_37 = arith.constant 0 : index
    %114 = vector.load %arg3[%c18, %c0_37] : memref<32x32xf32, #tpu.memory_space<vmem>>, vector<1x32xf32>
    tpu.vector_store %arg3[%c18, %c0_37], %113 {strides = array<i32>} : memref<32x32xf32, #tpu.memory_space<vmem>>, vector<1x32xf32>,
    %c19_i32 = arith.constant 19 : i32
    %115 = arith.addi %0, %c19_i32 : i32
    %116 = arith.index_cast %115 : i32 to index
    %117 = memref.load %arg1[%116] : memref<64xi32, #tpu.memory_space<smem>>
    %118 = arith.index_cast %117 : i32 to index
    %c0_38 = arith.constant 0 : index
    %119 = vector.load %arg2[%118, %c0_38] : memref<1024x32xf32, #tpu.memory_space<vmem>>, vector<1x32xf32>
    %c19 = arith.constant 19 : index
    %c0_39 = arith.constant 0 : index
    %120 = vector.load %arg3[%c19, %c0_39] : memref<32x32xf32, #tpu.memory_space<vmem>>, vector<1x32xf32>
    tpu.vector_store %arg3[%c19, %c0_39], %119 {strides = array<i32>} : memref<32x32xf32, #tpu.memory_space<vmem>>, vector<1x32xf32>,
    %c20_i32 = arith.constant 20 : i32
    %121 = arith.addi %0, %c20_i32 : i32
    %122 = arith.index_cast %121 : i32 to index
    %123 = memref.load %arg1[%122] : memref<64xi32, #tpu.memory_space<smem>>
    %124 = arith.index_cast %123 : i32 to index
    %c0_40 = arith.constant 0 : index
    %125 = vector.load %arg2[%124, %c0_40] : memref<1024x32xf32, #tpu.memory_space<vmem>>, vector<1x32xf32>
    %c20 = arith.constant 20 : index
    %c0_41 = arith.constant 0 : index
    %126 = vector.load %arg3[%c20, %c0_41] : memref<32x32xf32, #tpu.memory_space<vmem>>, vector<1x32xf32>
    tpu.vector_store %arg3[%c20, %c0_41], %125 {strides = array<i32>} : memref<32x32xf32, #tpu.memory_space<vmem>>, vector<1x32xf32>,
    %c21_i32 = arith.constant 21 : i32
    %127 = arith.addi %0, %c21_i32 : i32
    %128 = arith.index_cast %127 : i32 to index
    %129 = memref.load %arg1[%128] : memref<64xi32, #tpu.memory_space<smem>>
    %130 = arith.index_cast %129 : i32 to index
    %c0_42 = arith.constant 0 : index
    %131 = vector.load %arg2[%130, %c0_42] : memref<1024x32xf32, #tpu.memory_space<vmem>>, vector<1x32xf32>
    %c21 = arith.constant 21 : index
    %c0_43 = arith.constant 0 : index
    %132 = vector.load %arg3[%c21, %c0_43] : memref<32x32xf32, #tpu.memory_space<vmem>>, vector<1x32xf32>
    tpu.vector_store %arg3[%c21, %c0_43], %131 {strides = array<i32>} : memref<32x32xf32, #tpu.memory_space<vmem>>, vector<1x32xf32>,
    %c22_i32 = arith.constant 22 : i32
    %133 = arith.addi %0, %c22_i32 : i32
    %134 = arith.index_cast %133 : i32 to index
    %135 = memref.load %arg1[%134] : memref<64xi32, #tpu.memory_space<smem>>
    %136 = arith.index_cast %135 : i32 to index
    %c0_44 = arith.constant 0 : index
    %137 = vector.load %arg2[%136, %c0_44] : memref<1024x32xf32, #tpu.memory_space<vmem>>, vector<1x32xf32>
    %c22 = arith.constant 22 : index
    %c0_45 = arith.constant 0 : index
    %138 = vector.load %arg3[%c22, %c0_45] : memref<32x32xf32, #tpu.memory_space<vmem>>, vector<1x32xf32>
    tpu.vector_store %arg3[%c22, %c0_45], %137 {strides = array<i32>} : memref<32x32xf32, #tpu.memory_space<vmem>>, vector<1x32xf32>,
    %c23_i32 = arith.constant 23 : i32
    %139 = arith.addi %0, %c23_i32 : i32
    %140 = arith.index_cast %139 : i32 to index
    %141 = memref.load %arg1[%140] : memref<64xi32, #tpu.memory_space<smem>>
    %142 = arith.index_cast %141 : i32 to index
    %c0_46 = arith.constant 0 : index
    %143 = vector.load %arg2[%142, %c0_46] : memref<1024x32xf32, #tpu.memory_space<vmem>>, vector<1x32xf32>
    %c23 = arith.constant 23 : index
    %c0_47 = arith.constant 0 : index
    %144 = vector.load %arg3[%c23, %c0_47] : memref<32x32xf32, #tpu.memory_space<vmem>>, vector<1x32xf32>
    tpu.vector_store %arg3[%c23, %c0_47], %143 {strides = array<i32>} : memref<32x32xf32, #tpu.memory_space<vmem>>, vector<1x32xf32>,
    %c24_i32 = arith.constant 24 : i32
    %145 = arith.addi %0, %c24_i32 : i32
    %146 = arith.index_cast %145 : i32 to index
    %147 = memref.load %arg1[%146] : memref<64xi32, #tpu.memory_space<smem>>
    %148 = arith.index_cast %147 : i32 to index
    %c0_48 = arith.constant 0 : index
    %149 = vector.load %arg2[%148, %c0_48] : memref<1024x32xf32, #tpu.memory_space<vmem>>, vector<1x32xf32>
    %c24 = arith.constant 24 : index
    %c0_49 = arith.constant 0 : index
    %150 = vector.load %arg3[%c24, %c0_49] : memref<32x32xf32, #tpu.memory_space<vmem>>, vector<1x32xf32>
    tpu.vector_store %arg3[%c24, %c0_49], %149 {strides = array<i32>} : memref<32x32xf32, #tpu.memory_space<vmem>>, vector<1x32xf32>,
    %c25_i32 = arith.constant 25 : i32
    %151 = arith.addi %0, %c25_i32 : i32
    %152 = arith.index_cast %151 : i32 to index
    %153 = memref.load %arg1[%152] : memref<64xi32, #tpu.memory_space<smem>>
    %154 = arith.index_cast %153 : i32 to index
    %c0_50 = arith.constant 0 : index
    %155 = vector.load %arg2[%154, %c0_50] : memref<1024x32xf32, #tpu.memory_space<vmem>>, vector<1x32xf32>
    %c25 = arith.constant 25 : index
    %c0_51 = arith.constant 0 : index
    %156 = vector.load %arg3[%c25, %c0_51] : memref<32x32xf32, #tpu.memory_space<vmem>>, vector<1x32xf32>
    tpu.vector_store %arg3[%c25, %c0_51], %155 {strides = array<i32>} : memref<32x32xf32, #tpu.memory_space<vmem>>, vector<1x32xf32>,
    %c26_i32 = arith.constant 26 : i32
    %157 = arith.addi %0, %c26_i32 : i32
    %158 = arith.index_cast %157 : i32 to index
    %159 = memref.load %arg1[%158] : memref<64xi32, #tpu.memory_space<smem>>
    %160 = arith.index_cast %159 : i32 to index
    %c0_52 = arith.constant 0 : index
    %161 = vector.load %arg2[%160, %c0_52] : memref<1024x32xf32, #tpu.memory_space<vmem>>, vector<1x32xf32>
    %c26 = arith.constant 26 : index
    %c0_53 = arith.constant 0 : index
    %162 = vector.load %arg3[%c26, %c0_53] : memref<32x32xf32, #tpu.memory_space<vmem>>, vector<1x32xf32>
    tpu.vector_store %arg3[%c26, %c0_53], %161 {strides = array<i32>} : memref<32x32xf32, #tpu.memory_space<vmem>>, vector<1x32xf32>,
    %c27_i32 = arith.constant 27 : i32
    %163 = arith.addi %0, %c27_i32 : i32
    %164 = arith.index_cast %163 : i32 to index
    %165 = memref.load %arg1[%164] : memref<64xi32, #tpu.memory_space<smem>>
    %166 = arith.index_cast %165 : i32 to index
    %c0_54 = arith.constant 0 : index
    %167 = vector.load %arg2[%166, %c0_54] : memref<1024x32xf32, #tpu.memory_space<vmem>>, vector<1x32xf32>
    %c27 = arith.constant 27 : index
    %c0_55 = arith.constant 0 : index
    %168 = vector.load %arg3[%c27, %c0_55] : memref<32x32xf32, #tpu.memory_space<vmem>>, vector<1x32xf32>
    tpu.vector_store %arg3[%c27, %c0_55], %167 {strides = array<i32>} : memref<32x32xf32, #tpu.memory_space<vmem>>, vector<1x32xf32>,
    %c28_i32 = arith.constant 28 : i32
    %169 = arith.addi %0, %c28_i32 : i32
    %170 = arith.index_cast %169 : i32 to index
    %171 = memref.load %arg1[%170] : memref<64xi32, #tpu.memory_space<smem>>
    %172 = arith.index_cast %171 : i32 to index
    %c0_56 = arith.constant 0 : index
    %173 = vector.load %arg2[%172, %c0_56] : memref<1024x32xf32, #tpu.memory_space<vmem>>, vector<1x32xf32>
    %c28 = arith.constant 28 : index
    %c0_57 = arith.constant 0 : index
    %174 = vector.load %arg3[%c28, %c0_57] : memref<32x32xf32, #tpu.memory_space<vmem>>, vector<1x32xf32>
    tpu.vector_store %arg3[%c28, %c0_57], %173 {strides = array<i32>} : memref<32x32xf32, #tpu.memory_space<vmem>>, vector<1x32xf32>,
    %c29_i32 = arith.constant 29 : i32
    %175 = arith.addi %0, %c29_i32 : i32
    %176 = arith.index_cast %175 : i32 to index
    %177 = memref.load %arg1[%176] : memref<64xi32, #tpu.memory_space<smem>>
    %178 = arith.index_cast %177 : i32 to index
    %c0_58 = arith.constant 0 : index
    %179 = vector.load %arg2[%178, %c0_58] : memref<1024x32xf32, #tpu.memory_space<vmem>>, vector<1x32xf32>
    %c29 = arith.constant 29 : index
    %c0_59 = arith.constant 0 : index
    %180 = vector.load %arg3[%c29, %c0_59] : memref<32x32xf32, #tpu.memory_space<vmem>>, vector<1x32xf32>
    tpu.vector_store %arg3[%c29, %c0_59], %179 {strides = array<i32>} : memref<32x32xf32, #tpu.memory_space<vmem>>, vector<1x32xf32>,
    %c30_i32 = arith.constant 30 : i32
    %181 = arith.addi %0, %c30_i32 : i32
    %182 = arith.index_cast %181 : i32 to index
    %183 = memref.load %arg1[%182] : memref<64xi32, #tpu.memory_space<smem>>
    %184 = arith.index_cast %183 : i32 to index
    %c0_60 = arith.constant 0 : index
    %185 = vector.load %arg2[%184, %c0_60] : memref<1024x32xf32, #tpu.memory_space<vmem>>, vector<1x32xf32>
    %c30 = arith.constant 30 : index
    %c0_61 = arith.constant 0 : index
    %186 = vector.load %arg3[%c30, %c0_61] : memref<32x32xf32, #tpu.memory_space<vmem>>, vector<1x32xf32>
    tpu.vector_store %arg3[%c30, %c0_61], %185 {strides = array<i32>} : memref<32x32xf32, #tpu.memory_space<vmem>>, vector<1x32xf32>,
    %c31_i32 = arith.constant 31 : i32
    %187 = arith.addi %0, %c31_i32 : i32
    %188 = arith.index_cast %187 : i32 to index
    %189 = memref.load %arg1[%188] : memref<64xi32, #tpu.memory_space<smem>>
    %190 = arith.index_cast %189 : i32 to index
    %c0_62 = arith.constant 0 : index
    %191 = vector.load %arg2[%190, %c0_62] : memref<1024x32xf32, #tpu.memory_space<vmem>>, vector<1x32xf32>
    %c31 = arith.constant 31 : index
    %c0_63 = arith.constant 0 : index
    %192 = vector.load %arg3[%c31, %c0_63] : memref<32x32xf32, #tpu.memory_space<vmem>>, vector<1x32xf32>
    tpu.vector_store %arg3[%c31, %c0_63], %191 {strides = array<i32>} : memref<32x32xf32, #tpu.memory_space<vmem>>, vector<1x32xf32>,
    %c0_64 = arith.constant 0 : index
    %c0_65 = arith.constant 0 : index
    %193 = vector.load %arg3[%c0_64, %c0_65] : memref<32x32xf32, #tpu.memory_space<vmem>>, vector<32x32xf32>
    %194 = arith.mulf %193, %193 : vector<32x32xf32>
    %cst = arith.constant dense<0.000000e+00> : vector<32xf32>
    %195 = vector.multi_reduction <add>, %194, %cst [1] : vector<32x32xf32> to vector<32xf32>
    %196 = vector.shape_cast %195 : vector<32xf32> to vector<32x1xf32>
    %197 = math.sqrt %196 : vector<32x1xf32>
    %cst_66 = arith.constant 1.000000e-07 : f32
    %198 = vector.broadcast %cst_66 : f32 to vector<32x1xf32>
    %199 = arith.addf %197, %198 : vector<32x1xf32>
    %200 = tpu.reciprocal %199 : vector<32x1xf32> -> vector<32x1xf32>
    %201 = vector.broadcast %200 : vector<32x1xf32> to vector<32x32xf32>
    %202 = arith.mulf %193, %201 : vector<32x32xf32>
    %c0_67 = arith.constant 0 : index
    %c0_68 = arith.constant 0 : index
    %203 = vector.load %arg3[%c0_67, %c0_68] : memref<32x32xf32, #tpu.memory_space<vmem>>, vector<32x32xf32>
    tpu.vector_store %arg3[%c0_67, %c0_68], %202 {strides = array<i32>} : memref<32x32xf32, #tpu.memory_space<vmem>>, vector<32x32xf32>,
    return
  }
  func.func @transform_0(%arg0: i32, %arg1: memref<64xi32, #tpu.memory_space<smem>>) -> (i32, i32) {
    %c0_i32 = arith.constant 0 : i32
    %c0_i32_0 = arith.constant 0 : i32
    %c0_i32_1 = arith.constant 0 : i32
    return %c0_i32, %c0_i32_0 : i32, i32
  }
  func.func @transform_1(%arg0: i32, %arg1: memref<64xi32, #tpu.memory_space<smem>>) -> (i32, i32) {
    %c0_i32 = arith.constant 0 : i32
    %c0_i32_0 = arith.constant 0 : i32
    return %arg0, %c0_i32 : i32, i32
  }
}

module attributes {stable_mosaic.version = 11 : i64} {
  func.func @_gather_l2norm_kernel(%arg0: i32, %arg1: memref<64xi32, #tpu.memory_space<smem>>, %arg2: memref<256x128xf32, #tpu.memory_space<vmem>>, %arg3: memref<32x128xf32, #tpu.memory_space<vmem>>) attributes {dimension_semantics = [#tpu.dimension_semantics<parallel>], iteration_bounds = array<i64: 2>, scalar_prefetch = 1 : i64, scratch_operands = 0 : i64, tpu.core_type = #tpu.core_type<tc>, window_params = [{pipeline_mode = #tpu.pipeline_mode<synchronous>, transform_indices = @transform_0, window_bounds = array<i64: 256, 128>}, {transform_indices = @transform_1, window_bounds = array<i64: 32, 128>}]} {
    %c32_i32 = arith.constant 32 : i32
    %0 = arith.muli %arg0, %c32_i32 : i32
    %c0_i32 = arith.constant 0 : i32
    %1 = arith.addi %0, %c0_i32 : i32
    %2 = arith.index_cast %1 : i32 to index
    %3 = memref.load %arg1[%2] : memref<64xi32, #tpu.memory_space<smem>>
    %4 = arith.index_cast %3 : i32 to index
    %c0 = arith.constant 0 : index
    %5 = vector.load %arg2[%4, %c0] : memref<256x128xf32, #tpu.memory_space<vmem>>, vector<1x128xf32>
    %c0_0 = arith.constant 0 : index
    %c0_1 = arith.constant 0 : index
    %6 = vector.load %arg3[%c0_0, %c0_1] : memref<32x128xf32, #tpu.memory_space<vmem>>, vector<1x128xf32>
    tpu.vector_store %arg3[%c0_0, %c0_1], %5 {strides = array<i32>} : memref<32x128xf32, #tpu.memory_space<vmem>>, vector<1x128xf32>,
    %c1_i32 = arith.constant 1 : i32
    %7 = arith.addi %0, %c1_i32 : i32
    %8 = arith.index_cast %7 : i32 to index
    %9 = memref.load %arg1[%8] : memref<64xi32, #tpu.memory_space<smem>>
    %10 = arith.index_cast %9 : i32 to index
    %c0_2 = arith.constant 0 : index
    %11 = vector.load %arg2[%10, %c0_2] : memref<256x128xf32, #tpu.memory_space<vmem>>, vector<1x128xf32>
    %c1 = arith.constant 1 : index
    %c0_3 = arith.constant 0 : index
    %12 = vector.load %arg3[%c1, %c0_3] : memref<32x128xf32, #tpu.memory_space<vmem>>, vector<1x128xf32>
    tpu.vector_store %arg3[%c1, %c0_3], %11 {strides = array<i32>} : memref<32x128xf32, #tpu.memory_space<vmem>>, vector<1x128xf32>,
    %c2_i32 = arith.constant 2 : i32
    %13 = arith.addi %0, %c2_i32 : i32
    %14 = arith.index_cast %13 : i32 to index
    %15 = memref.load %arg1[%14] : memref<64xi32, #tpu.memory_space<smem>>
    %16 = arith.index_cast %15 : i32 to index
    %c0_4 = arith.constant 0 : index
    %17 = vector.load %arg2[%16, %c0_4] : memref<256x128xf32, #tpu.memory_space<vmem>>, vector<1x128xf32>
    %c2 = arith.constant 2 : index
    %c0_5 = arith.constant 0 : index
    %18 = vector.load %arg3[%c2, %c0_5] : memref<32x128xf32, #tpu.memory_space<vmem>>, vector<1x128xf32>
    tpu.vector_store %arg3[%c2, %c0_5], %17 {strides = array<i32>} : memref<32x128xf32, #tpu.memory_space<vmem>>, vector<1x128xf32>,
    %c3_i32 = arith.constant 3 : i32
    %19 = arith.addi %0, %c3_i32 : i32
    %20 = arith.index_cast %19 : i32 to index
    %21 = memref.load %arg1[%20] : memref<64xi32, #tpu.memory_space<smem>>
    %22 = arith.index_cast %21 : i32 to index
    %c0_6 = arith.constant 0 : index
    %23 = vector.load %arg2[%22, %c0_6] : memref<256x128xf32, #tpu.memory_space<vmem>>, vector<1x128xf32>
    %c3 = arith.constant 3 : index
    %c0_7 = arith.constant 0 : index
    %24 = vector.load %arg3[%c3, %c0_7] : memref<32x128xf32, #tpu.memory_space<vmem>>, vector<1x128xf32>
    tpu.vector_store %arg3[%c3, %c0_7], %23 {strides = array<i32>} : memref<32x128xf32, #tpu.memory_space<vmem>>, vector<1x128xf32>,
    %c4_i32 = arith.constant 4 : i32
    %25 = arith.addi %0, %c4_i32 : i32
    %26 = arith.index_cast %25 : i32 to index
    %27 = memref.load %arg1[%26] : memref<64xi32, #tpu.memory_space<smem>>
    %28 = arith.index_cast %27 : i32 to index
    %c0_8 = arith.constant 0 : index
    %29 = vector.load %arg2[%28, %c0_8] : memref<256x128xf32, #tpu.memory_space<vmem>>, vector<1x128xf32>
    %c4 = arith.constant 4 : index
    %c0_9 = arith.constant 0 : index
    %30 = vector.load %arg3[%c4, %c0_9] : memref<32x128xf32, #tpu.memory_space<vmem>>, vector<1x128xf32>
    tpu.vector_store %arg3[%c4, %c0_9], %29 {strides = array<i32>} : memref<32x128xf32, #tpu.memory_space<vmem>>, vector<1x128xf32>,
    %c5_i32 = arith.constant 5 : i32
    %31 = arith.addi %0, %c5_i32 : i32
    %32 = arith.index_cast %31 : i32 to index
    %33 = memref.load %arg1[%32] : memref<64xi32, #tpu.memory_space<smem>>
    %34 = arith.index_cast %33 : i32 to index
    %c0_10 = arith.constant 0 : index
    %35 = vector.load %arg2[%34, %c0_10] : memref<256x128xf32, #tpu.memory_space<vmem>>, vector<1x128xf32>
    %c5 = arith.constant 5 : index
    %c0_11 = arith.constant 0 : index
    %36 = vector.load %arg3[%c5, %c0_11] : memref<32x128xf32, #tpu.memory_space<vmem>>, vector<1x128xf32>
    tpu.vector_store %arg3[%c5, %c0_11], %35 {strides = array<i32>} : memref<32x128xf32, #tpu.memory_space<vmem>>, vector<1x128xf32>,
    %c6_i32 = arith.constant 6 : i32
    %37 = arith.addi %0, %c6_i32 : i32
    %38 = arith.index_cast %37 : i32 to index
    %39 = memref.load %arg1[%38] : memref<64xi32, #tpu.memory_space<smem>>
    %40 = arith.index_cast %39 : i32 to index
    %c0_12 = arith.constant 0 : index
    %41 = vector.load %arg2[%40, %c0_12] : memref<256x128xf32, #tpu.memory_space<vmem>>, vector<1x128xf32>
    %c6 = arith.constant 6 : index
    %c0_13 = arith.constant 0 : index
    %42 = vector.load %arg3[%c6, %c0_13] : memref<32x128xf32, #tpu.memory_space<vmem>>, vector<1x128xf32>
    tpu.vector_store %arg3[%c6, %c0_13], %41 {strides = array<i32>} : memref<32x128xf32, #tpu.memory_space<vmem>>, vector<1x128xf32>,
    %c7_i32 = arith.constant 7 : i32
    %43 = arith.addi %0, %c7_i32 : i32
    %44 = arith.index_cast %43 : i32 to index
    %45 = memref.load %arg1[%44] : memref<64xi32, #tpu.memory_space<smem>>
    %46 = arith.index_cast %45 : i32 to index
    %c0_14 = arith.constant 0 : index
    %47 = vector.load %arg2[%46, %c0_14] : memref<256x128xf32, #tpu.memory_space<vmem>>, vector<1x128xf32>
    %c7 = arith.constant 7 : index
    %c0_15 = arith.constant 0 : index
    %48 = vector.load %arg3[%c7, %c0_15] : memref<32x128xf32, #tpu.memory_space<vmem>>, vector<1x128xf32>
    tpu.vector_store %arg3[%c7, %c0_15], %47 {strides = array<i32>} : memref<32x128xf32, #tpu.memory_space<vmem>>, vector<1x128xf32>,
    %c8_i32 = arith.constant 8 : i32
    %49 = arith.addi %0, %c8_i32 : i32
    %50 = arith.index_cast %49 : i32 to index
    %51 = memref.load %arg1[%50] : memref<64xi32, #tpu.memory_space<smem>>
    %52 = arith.index_cast %51 : i32 to index
    %c0_16 = arith.constant 0 : index
    %53 = vector.load %arg2[%52, %c0_16] : memref<256x128xf32, #tpu.memory_space<vmem>>, vector<1x128xf32>
    %c8 = arith.constant 8 : index
    %c0_17 = arith.constant 0 : index
    %54 = vector.load %arg3[%c8, %c0_17] : memref<32x128xf32, #tpu.memory_space<vmem>>, vector<1x128xf32>
    tpu.vector_store %arg3[%c8, %c0_17], %53 {strides = array<i32>} : memref<32x128xf32, #tpu.memory_space<vmem>>, vector<1x128xf32>,
    %c9_i32 = arith.constant 9 : i32
    %55 = arith.addi %0, %c9_i32 : i32
    %56 = arith.index_cast %55 : i32 to index
    %57 = memref.load %arg1[%56] : memref<64xi32, #tpu.memory_space<smem>>
    %58 = arith.index_cast %57 : i32 to index
    %c0_18 = arith.constant 0 : index
    %59 = vector.load %arg2[%58, %c0_18] : memref<256x128xf32, #tpu.memory_space<vmem>>, vector<1x128xf32>
    %c9 = arith.constant 9 : index
    %c0_19 = arith.constant 0 : index
    %60 = vector.load %arg3[%c9, %c0_19] : memref<32x128xf32, #tpu.memory_space<vmem>>, vector<1x128xf32>
    tpu.vector_store %arg3[%c9, %c0_19], %59 {strides = array<i32>} : memref<32x128xf32, #tpu.memory_space<vmem>>, vector<1x128xf32>,
    %c10_i32 = arith.constant 10 : i32
    %61 = arith.addi %0, %c10_i32 : i32
    %62 = arith.index_cast %61 : i32 to index
    %63 = memref.load %arg1[%62] : memref<64xi32, #tpu.memory_space<smem>>
    %64 = arith.index_cast %63 : i32 to index
    %c0_20 = arith.constant 0 : index
    %65 = vector.load %arg2[%64, %c0_20] : memref<256x128xf32, #tpu.memory_space<vmem>>, vector<1x128xf32>
    %c10 = arith.constant 10 : index
    %c0_21 = arith.constant 0 : index
    %66 = vector.load %arg3[%c10, %c0_21] : memref<32x128xf32, #tpu.memory_space<vmem>>, vector<1x128xf32>
    tpu.vector_store %arg3[%c10, %c0_21], %65 {strides = array<i32>} : memref<32x128xf32, #tpu.memory_space<vmem>>, vector<1x128xf32>,
    %c11_i32 = arith.constant 11 : i32
    %67 = arith.addi %0, %c11_i32 : i32
    %68 = arith.index_cast %67 : i32 to index
    %69 = memref.load %arg1[%68] : memref<64xi32, #tpu.memory_space<smem>>
    %70 = arith.index_cast %69 : i32 to index
    %c0_22 = arith.constant 0 : index
    %71 = vector.load %arg2[%70, %c0_22] : memref<256x128xf32, #tpu.memory_space<vmem>>, vector<1x128xf32>
    %c11 = arith.constant 11 : index
    %c0_23 = arith.constant 0 : index
    %72 = vector.load %arg3[%c11, %c0_23] : memref<32x128xf32, #tpu.memory_space<vmem>>, vector<1x128xf32>
    tpu.vector_store %arg3[%c11, %c0_23], %71 {strides = array<i32>} : memref<32x128xf32, #tpu.memory_space<vmem>>, vector<1x128xf32>,
    %c12_i32 = arith.constant 12 : i32
    %73 = arith.addi %0, %c12_i32 : i32
    %74 = arith.index_cast %73 : i32 to index
    %75 = memref.load %arg1[%74] : memref<64xi32, #tpu.memory_space<smem>>
    %76 = arith.index_cast %75 : i32 to index
    %c0_24 = arith.constant 0 : index
    %77 = vector.load %arg2[%76, %c0_24] : memref<256x128xf32, #tpu.memory_space<vmem>>, vector<1x128xf32>
    %c12 = arith.constant 12 : index
    %c0_25 = arith.constant 0 : index
    %78 = vector.load %arg3[%c12, %c0_25] : memref<32x128xf32, #tpu.memory_space<vmem>>, vector<1x128xf32>
    tpu.vector_store %arg3[%c12, %c0_25], %77 {strides = array<i32>} : memref<32x128xf32, #tpu.memory_space<vmem>>, vector<1x128xf32>,
    %c13_i32 = arith.constant 13 : i32
    %79 = arith.addi %0, %c13_i32 : i32
    %80 = arith.index_cast %79 : i32 to index
    %81 = memref.load %arg1[%80] : memref<64xi32, #tpu.memory_space<smem>>
    %82 = arith.index_cast %81 : i32 to index
    %c0_26 = arith.constant 0 : index
    %83 = vector.load %arg2[%82, %c0_26] : memref<256x128xf32, #tpu.memory_space<vmem>>, vector<1x128xf32>
    %c13 = arith.constant 13 : index
    %c0_27 = arith.constant 0 : index
    %84 = vector.load %arg3[%c13, %c0_27] : memref<32x128xf32, #tpu.memory_space<vmem>>, vector<1x128xf32>
    tpu.vector_store %arg3[%c13, %c0_27], %83 {strides = array<i32>} : memref<32x128xf32, #tpu.memory_space<vmem>>, vector<1x128xf32>,
    %c14_i32 = arith.constant 14 : i32
    %85 = arith.addi %0, %c14_i32 : i32
    %86 = arith.index_cast %85 : i32 to index
    %87 = memref.load %arg1[%86] : memref<64xi32, #tpu.memory_space<smem>>
    %88 = arith.index_cast %87 : i32 to index
    %c0_28 = arith.constant 0 : index
    %89 = vector.load %arg2[%88, %c0_28] : memref<256x128xf32, #tpu.memory_space<vmem>>, vector<1x128xf32>
    %c14 = arith.constant 14 : index
    %c0_29 = arith.constant 0 : index
    %90 = vector.load %arg3[%c14, %c0_29] : memref<32x128xf32, #tpu.memory_space<vmem>>, vector<1x128xf32>
    tpu.vector_store %arg3[%c14, %c0_29], %89 {strides = array<i32>} : memref<32x128xf32, #tpu.memory_space<vmem>>, vector<1x128xf32>,
    %c15_i32 = arith.constant 15 : i32
    %91 = arith.addi %0, %c15_i32 : i32
    %92 = arith.index_cast %91 : i32 to index
    %93 = memref.load %arg1[%92] : memref<64xi32, #tpu.memory_space<smem>>
    %94 = arith.index_cast %93 : i32 to index
    %c0_30 = arith.constant 0 : index
    %95 = vector.load %arg2[%94, %c0_30] : memref<256x128xf32, #tpu.memory_space<vmem>>, vector<1x128xf32>
    %c15 = arith.constant 15 : index
    %c0_31 = arith.constant 0 : index
    %96 = vector.load %arg3[%c15, %c0_31] : memref<32x128xf32, #tpu.memory_space<vmem>>, vector<1x128xf32>
    tpu.vector_store %arg3[%c15, %c0_31], %95 {strides = array<i32>} : memref<32x128xf32, #tpu.memory_space<vmem>>, vector<1x128xf32>,
    %c16_i32 = arith.constant 16 : i32
    %97 = arith.addi %0, %c16_i32 : i32
    %98 = arith.index_cast %97 : i32 to index
    %99 = memref.load %arg1[%98] : memref<64xi32, #tpu.memory_space<smem>>
    %100 = arith.index_cast %99 : i32 to index
    %c0_32 = arith.constant 0 : index
    %101 = vector.load %arg2[%100, %c0_32] : memref<256x128xf32, #tpu.memory_space<vmem>>, vector<1x128xf32>
    %c16 = arith.constant 16 : index
    %c0_33 = arith.constant 0 : index
    %102 = vector.load %arg3[%c16, %c0_33] : memref<32x128xf32, #tpu.memory_space<vmem>>, vector<1x128xf32>
    tpu.vector_store %arg3[%c16, %c0_33], %101 {strides = array<i32>} : memref<32x128xf32, #tpu.memory_space<vmem>>, vector<1x128xf32>,
    %c17_i32 = arith.constant 17 : i32
    %103 = arith.addi %0, %c17_i32 : i32
    %104 = arith.index_cast %103 : i32 to index
    %105 = memref.load %arg1[%104] : memref<64xi32, #tpu.memory_space<smem>>
    %106 = arith.index_cast %105 : i32 to index
    %c0_34 = arith.constant 0 : index
    %107 = vector.load %arg2[%106, %c0_34] : memref<256x128xf32, #tpu.memory_space<vmem>>, vector<1x128xf32>
    %c17 = arith.constant 17 : index
    %c0_35 = arith.constant 0 : index
    %108 = vector.load %arg3[%c17, %c0_35] : memref<32x128xf32, #tpu.memory_space<vmem>>, vector<1x128xf32>
    tpu.vector_store %arg3[%c17, %c0_35], %107 {strides = array<i32>} : memref<32x128xf32, #tpu.memory_space<vmem>>, vector<1x128xf32>,
    %c18_i32 = arith.constant 18 : i32
    %109 = arith.addi %0, %c18_i32 : i32
    %110 = arith.index_cast %109 : i32 to index
    %111 = memref.load %arg1[%110] : memref<64xi32, #tpu.memory_space<smem>>
    %112 = arith.index_cast %111 : i32 to index
    %c0_36 = arith.constant 0 : index
    %113 = vector.load %arg2[%112, %c0_36] : memref<256x128xf32, #tpu.memory_space<vmem>>, vector<1x128xf32>
    %c18 = arith.constant 18 : index
    %c0_37 = arith.constant 0 : index
    %114 = vector.load %arg3[%c18, %c0_37] : memref<32x128xf32, #tpu.memory_space<vmem>>, vector<1x128xf32>
    tpu.vector_store %arg3[%c18, %c0_37], %113 {strides = array<i32>} : memref<32x128xf32, #tpu.memory_space<vmem>>, vector<1x128xf32>,
    %c19_i32 = arith.constant 19 : i32
    %115 = arith.addi %0, %c19_i32 : i32
    %116 = arith.index_cast %115 : i32 to index
    %117 = memref.load %arg1[%116] : memref<64xi32, #tpu.memory_space<smem>>
    %118 = arith.index_cast %117 : i32 to index
    %c0_38 = arith.constant 0 : index
    %119 = vector.load %arg2[%118, %c0_38] : memref<256x128xf32, #tpu.memory_space<vmem>>, vector<1x128xf32>
    %c19 = arith.constant 19 : index
    %c0_39 = arith.constant 0 : index
    %120 = vector.load %arg3[%c19, %c0_39] : memref<32x128xf32, #tpu.memory_space<vmem>>, vector<1x128xf32>
    tpu.vector_store %arg3[%c19, %c0_39], %119 {strides = array<i32>} : memref<32x128xf32, #tpu.memory_space<vmem>>, vector<1x128xf32>,
    %c20_i32 = arith.constant 20 : i32
    %121 = arith.addi %0, %c20_i32 : i32
    %122 = arith.index_cast %121 : i32 to index
    %123 = memref.load %arg1[%122] : memref<64xi32, #tpu.memory_space<smem>>
    %124 = arith.index_cast %123 : i32 to index
    %c0_40 = arith.constant 0 : index
    %125 = vector.load %arg2[%124, %c0_40] : memref<256x128xf32, #tpu.memory_space<vmem>>, vector<1x128xf32>
    %c20 = arith.constant 20 : index
    %c0_41 = arith.constant 0 : index
    %126 = vector.load %arg3[%c20, %c0_41] : memref<32x128xf32, #tpu.memory_space<vmem>>, vector<1x128xf32>
    tpu.vector_store %arg3[%c20, %c0_41], %125 {strides = array<i32>} : memref<32x128xf32, #tpu.memory_space<vmem>>, vector<1x128xf32>,
    %c21_i32 = arith.constant 21 : i32
    %127 = arith.addi %0, %c21_i32 : i32
    %128 = arith.index_cast %127 : i32 to index
    %129 = memref.load %arg1[%128] : memref<64xi32, #tpu.memory_space<smem>>
    %130 = arith.index_cast %129 : i32 to index
    %c0_42 = arith.constant 0 : index
    %131 = vector.load %arg2[%130, %c0_42] : memref<256x128xf32, #tpu.memory_space<vmem>>, vector<1x128xf32>
    %c21 = arith.constant 21 : index
    %c0_43 = arith.constant 0 : index
    %132 = vector.load %arg3[%c21, %c0_43] : memref<32x128xf32, #tpu.memory_space<vmem>>, vector<1x128xf32>
    tpu.vector_store %arg3[%c21, %c0_43], %131 {strides = array<i32>} : memref<32x128xf32, #tpu.memory_space<vmem>>, vector<1x128xf32>,
    %c22_i32 = arith.constant 22 : i32
    %133 = arith.addi %0, %c22_i32 : i32
    %134 = arith.index_cast %133 : i32 to index
    %135 = memref.load %arg1[%134] : memref<64xi32, #tpu.memory_space<smem>>
    %136 = arith.index_cast %135 : i32 to index
    %c0_44 = arith.constant 0 : index
    %137 = vector.load %arg2[%136, %c0_44] : memref<256x128xf32, #tpu.memory_space<vmem>>, vector<1x128xf32>
    %c22 = arith.constant 22 : index
    %c0_45 = arith.constant 0 : index
    %138 = vector.load %arg3[%c22, %c0_45] : memref<32x128xf32, #tpu.memory_space<vmem>>, vector<1x128xf32>
    tpu.vector_store %arg3[%c22, %c0_45], %137 {strides = array<i32>} : memref<32x128xf32, #tpu.memory_space<vmem>>, vector<1x128xf32>,
    %c23_i32 = arith.constant 23 : i32
    %139 = arith.addi %0, %c23_i32 : i32
    %140 = arith.index_cast %139 : i32 to index
    %141 = memref.load %arg1[%140] : memref<64xi32, #tpu.memory_space<smem>>
    %142 = arith.index_cast %141 : i32 to index
    %c0_46 = arith.constant 0 : index
    %143 = vector.load %arg2[%142, %c0_46] : memref<256x128xf32, #tpu.memory_space<vmem>>, vector<1x128xf32>
    %c23 = arith.constant 23 : index
    %c0_47 = arith.constant 0 : index
    %144 = vector.load %arg3[%c23, %c0_47] : memref<32x128xf32, #tpu.memory_space<vmem>>, vector<1x128xf32>
    tpu.vector_store %arg3[%c23, %c0_47], %143 {strides = array<i32>} : memref<32x128xf32, #tpu.memory_space<vmem>>, vector<1x128xf32>,
    %c24_i32 = arith.constant 24 : i32
    %145 = arith.addi %0, %c24_i32 : i32
    %146 = arith.index_cast %145 : i32 to index
    %147 = memref.load %arg1[%146] : memref<64xi32, #tpu.memory_space<smem>>
    %148 = arith.index_cast %147 : i32 to index
    %c0_48 = arith.constant 0 : index
    %149 = vector.load %arg2[%148, %c0_48] : memref<256x128xf32, #tpu.memory_space<vmem>>, vector<1x128xf32>
    %c24 = arith.constant 24 : index
    %c0_49 = arith.constant 0 : index
    %150 = vector.load %arg3[%c24, %c0_49] : memref<32x128xf32, #tpu.memory_space<vmem>>, vector<1x128xf32>
    tpu.vector_store %arg3[%c24, %c0_49], %149 {strides = array<i32>} : memref<32x128xf32, #tpu.memory_space<vmem>>, vector<1x128xf32>,
    %c25_i32 = arith.constant 25 : i32
    %151 = arith.addi %0, %c25_i32 : i32
    %152 = arith.index_cast %151 : i32 to index
    %153 = memref.load %arg1[%152] : memref<64xi32, #tpu.memory_space<smem>>
    %154 = arith.index_cast %153 : i32 to index
    %c0_50 = arith.constant 0 : index
    %155 = vector.load %arg2[%154, %c0_50] : memref<256x128xf32, #tpu.memory_space<vmem>>, vector<1x128xf32>
    %c25 = arith.constant 25 : index
    %c0_51 = arith.constant 0 : index
    %156 = vector.load %arg3[%c25, %c0_51] : memref<32x128xf32, #tpu.memory_space<vmem>>, vector<1x128xf32>
    tpu.vector_store %arg3[%c25, %c0_51], %155 {strides = array<i32>} : memref<32x128xf32, #tpu.memory_space<vmem>>, vector<1x128xf32>,
    %c26_i32 = arith.constant 26 : i32
    %157 = arith.addi %0, %c26_i32 : i32
    %158 = arith.index_cast %157 : i32 to index
    %159 = memref.load %arg1[%158] : memref<64xi32, #tpu.memory_space<smem>>
    %160 = arith.index_cast %159 : i32 to index
    %c0_52 = arith.constant 0 : index
    %161 = vector.load %arg2[%160, %c0_52] : memref<256x128xf32, #tpu.memory_space<vmem>>, vector<1x128xf32>
    %c26 = arith.constant 26 : index
    %c0_53 = arith.constant 0 : index
    %162 = vector.load %arg3[%c26, %c0_53] : memref<32x128xf32, #tpu.memory_space<vmem>>, vector<1x128xf32>
    tpu.vector_store %arg3[%c26, %c0_53], %161 {strides = array<i32>} : memref<32x128xf32, #tpu.memory_space<vmem>>, vector<1x128xf32>,
    %c27_i32 = arith.constant 27 : i32
    %163 = arith.addi %0, %c27_i32 : i32
    %164 = arith.index_cast %163 : i32 to index
    %165 = memref.load %arg1[%164] : memref<64xi32, #tpu.memory_space<smem>>
    %166 = arith.index_cast %165 : i32 to index
    %c0_54 = arith.constant 0 : index
    %167 = vector.load %arg2[%166, %c0_54] : memref<256x128xf32, #tpu.memory_space<vmem>>, vector<1x128xf32>
    %c27 = arith.constant 27 : index
    %c0_55 = arith.constant 0 : index
    %168 = vector.load %arg3[%c27, %c0_55] : memref<32x128xf32, #tpu.memory_space<vmem>>, vector<1x128xf32>
    tpu.vector_store %arg3[%c27, %c0_55], %167 {strides = array<i32>} : memref<32x128xf32, #tpu.memory_space<vmem>>, vector<1x128xf32>,
    %c28_i32 = arith.constant 28 : i32
    %169 = arith.addi %0, %c28_i32 : i32
    %170 = arith.index_cast %169 : i32 to index
    %171 = memref.load %arg1[%170] : memref<64xi32, #tpu.memory_space<smem>>
    %172 = arith.index_cast %171 : i32 to index
    %c0_56 = arith.constant 0 : index
    %173 = vector.load %arg2[%172, %c0_56] : memref<256x128xf32, #tpu.memory_space<vmem>>, vector<1x128xf32>
    %c28 = arith.constant 28 : index
    %c0_57 = arith.constant 0 : index
    %174 = vector.load %arg3[%c28, %c0_57] : memref<32x128xf32, #tpu.memory_space<vmem>>, vector<1x128xf32>
    tpu.vector_store %arg3[%c28, %c0_57], %173 {strides = array<i32>} : memref<32x128xf32, #tpu.memory_space<vmem>>, vector<1x128xf32>,
    %c29_i32 = arith.constant 29 : i32
    %175 = arith.addi %0, %c29_i32 : i32
    %176 = arith.index_cast %175 : i32 to index
    %177 = memref.load %arg1[%176] : memref<64xi32, #tpu.memory_space<smem>>
    %178 = arith.index_cast %177 : i32 to index
    %c0_58 = arith.constant 0 : index
    %179 = vector.load %arg2[%178, %c0_58] : memref<256x128xf32, #tpu.memory_space<vmem>>, vector<1x128xf32>
    %c29 = arith.constant 29 : index
    %c0_59 = arith.constant 0 : index
    %180 = vector.load %arg3[%c29, %c0_59] : memref<32x128xf32, #tpu.memory_space<vmem>>, vector<1x128xf32>
    tpu.vector_store %arg3[%c29, %c0_59], %179 {strides = array<i32>} : memref<32x128xf32, #tpu.memory_space<vmem>>, vector<1x128xf32>,
    %c30_i32 = arith.constant 30 : i32
    %181 = arith.addi %0, %c30_i32 : i32
    %182 = arith.index_cast %181 : i32 to index
    %183 = memref.load %arg1[%182] : memref<64xi32, #tpu.memory_space<smem>>
    %184 = arith.index_cast %183 : i32 to index
    %c0_60 = arith.constant 0 : index
    %185 = vector.load %arg2[%184, %c0_60] : memref<256x128xf32, #tpu.memory_space<vmem>>, vector<1x128xf32>
    %c30 = arith.constant 30 : index
    %c0_61 = arith.constant 0 : index
    %186 = vector.load %arg3[%c30, %c0_61] : memref<32x128xf32, #tpu.memory_space<vmem>>, vector<1x128xf32>
    tpu.vector_store %arg3[%c30, %c0_61], %185 {strides = array<i32>} : memref<32x128xf32, #tpu.memory_space<vmem>>, vector<1x128xf32>,
    %c31_i32 = arith.constant 31 : i32
    %187 = arith.addi %0, %c31_i32 : i32
    %188 = arith.index_cast %187 : i32 to index
    %189 = memref.load %arg1[%188] : memref<64xi32, #tpu.memory_space<smem>>
    %190 = arith.index_cast %189 : i32 to index
    %c0_62 = arith.constant 0 : index
    %191 = vector.load %arg2[%190, %c0_62] : memref<256x128xf32, #tpu.memory_space<vmem>>, vector<1x128xf32>
    %c31 = arith.constant 31 : index
    %c0_63 = arith.constant 0 : index
    %192 = vector.load %arg3[%c31, %c0_63] : memref<32x128xf32, #tpu.memory_space<vmem>>, vector<1x128xf32>
    tpu.vector_store %arg3[%c31, %c0_63], %191 {strides = array<i32>} : memref<32x128xf32, #tpu.memory_space<vmem>>, vector<1x128xf32>,
    %c0_64 = arith.constant 0 : index
    %c0_65 = arith.constant 0 : index
    %193 = vector.load %arg3[%c0_64, %c0_65] : memref<32x128xf32, #tpu.memory_space<vmem>>, vector<32x128xf32>
    %194 = arith.mulf %193, %193 : vector<32x128xf32>
    %cst = arith.constant dense<0.000000e+00> : vector<32xf32>
    %195 = vector.multi_reduction <add>, %194, %cst [1] : vector<32x128xf32> to vector<32xf32>
    %196 = vector.shape_cast %195 : vector<32xf32> to vector<32x1xf32>
    %197 = math.sqrt %196 : vector<32x1xf32>
    %cst_66 = arith.constant 1.000000e-07 : f32
    %198 = vector.broadcast %cst_66 : f32 to vector<32x1xf32>
    %199 = arith.addf %197, %198 : vector<32x1xf32>
    %200 = tpu.reciprocal %199 : vector<32x1xf32> -> vector<32x1xf32>
    %201 = vector.broadcast %200 : vector<32x1xf32> to vector<32x128xf32>
    %202 = arith.mulf %193, %201 : vector<32x128xf32>
    %c0_67 = arith.constant 0 : index
    %c0_68 = arith.constant 0 : index
    %203 = vector.load %arg3[%c0_67, %c0_68] : memref<32x128xf32, #tpu.memory_space<vmem>>, vector<32x128xf32>
    tpu.vector_store %arg3[%c0_67, %c0_68], %202 {strides = array<i32>} : memref<32x128xf32, #tpu.memory_space<vmem>>, vector<32x128xf32>,
    return
  }
  func.func @transform_0(%arg0: i32, %arg1: memref<64xi32, #tpu.memory_space<smem>>) -> (i32, i32) {
    %c0_i32 = arith.constant 0 : i32
    %c0_i32_0 = arith.constant 0 : i32
    %c0_i32_1 = arith.constant 0 : i32
    return %c0_i32, %c0_i32_0 : i32, i32
  }
  func.func @transform_1(%arg0: i32, %arg1: memref<64xi32, #tpu.memory_space<smem>>) -> (i32, i32) {
    %c0_i32 = arith.constant 0 : i32
    %c0_i32_0 = arith.constant 0 : i32
    return %arg0, %c0_i32 : i32, i32
  }
}

</mosaic_0001>

<llo_original>
// kernel: _lambda_.5
$region0: #{_lambda_.5}
  #allocation0 [shape = 'u32[]', space=smem, size = 0x4, offset = 0x4, fixed_abs, tag = 'smem constant byte address 0x4 - core index']
  #allocation1 [shape = 'u32[72,128]{1,0:T(1,128)}', space=vmem, size = 0x9000, scoped, tag = 'internal scratch']
  #allocation2 [shape = 's32[1]{0}', space=sflag, size = 0x4, scoped, tag = 'scoped memory for _lambda_.5']
  #allocation3 [shape = 'u8[512]{0}', space=smem, size = 0x200, scoped, tag = 'prefetched SMEM operand 0']
  %s0 = inlined_call_operand.vmem [shape: s32[64], index: 0, kind: input, shape index: {}]
  %s1 = inlined_call_operand.vmem [shape: f32[4096,8], index: 1, kind: input, shape index: {}]
  %s2 = inlined_call_operand.vmem [shape: f32[64,8], index: 2, kind: output, shape index: {}]
  %s3 = sld [smem:[#allocation0]]
  $region37: #{_lambda_.5} parent=0
    _
  %s5 = ssub.s32 1, %s3
  %s6 = scalar_select 0, %s5, %s3
  %s8 = sshll.u32 %s0, 4
  %s9 = int_to_ptr.vmem [resolvable:$true] %s8
  %11 = dma.vmem_to_smem %s9, 16, [#allocation3], [#allocation2]
  %13 = dma.done [#allocation2], 16
  %14 = sfence
  loop: start=0, step=1, limit=4
  $region2: #{_lambda_.5} parent=0 // loop_pre_header
    _
  $region3: #{_lambda_.5} parent=0 // loop_header
    %s16 = sphi 0, %s20
    %p17 = scmp.ge.s32.totalorder %s16, 4
    %s24 = sphi 0, %s24
    %s26 = sphi 0, %s24
    %s27 = sphi 0, %s26
    %s41 = sphi 0, %s27
    %s47 = sphi 0, %s49
    %s50 = sphi 0, %s47
    %s51 = sphi 0, %s50
    %s67 = sphi 0, %s51
  $region4: #{_lambda_.5} parent=0 // loop_header_branch
    %19 = sbr.rel (%p17) target = $region8
  $region5: #{_lambda_.5} parent=0 // loop_body
    %s21 = ssub.s32 %s16, 1
    %s22 = ssub.s32 %s16, 2
    %s23 = sadd.s32 %s16, 1
    %s25 = sadd.s32 %s24, 1
    %p28 = scmp.eq.s32.totalorder %s16, 1
    %p29 = scmp.ne.s32.totalorder %s24, %s26
    %p30 = scmp.eq.s32.totalorder %s16, 0
    %p31 = por %p29, %p30
    %p32 = scmp.ne.s32.totalorder %s24, %s26
    %p33 = scmp.eq.s32.totalorder %s21, 1
    %p34 = por %p32, %p33
    %p35 = scmp.ne.s32.totalorder %s26, %s27
    %p36 = scmp.eq.s32.totalorder %s21, 0
    %p37 = por %p35, %p36
    %p38 = scmp.ne.s32.totalorder %s26, %s27
    %p39 = scmp.eq.s32.totalorder %s22, 1
    %p40 = por %p38, %p39
    %p42 = scmp.ne.s32.totalorder %s27, %s41
    %p43 = scmp.eq.s32.totalorder %s22, 0
    %p44 = por %p42, %p43
    %s45 = ssub.s32 %s16, %s23
    %p46 = scmp.eq.s32.totalorder %s45, 0
    %s48 = sadd.s32 %s47, 1
    %s49 = scalar_select %p46, %s47, %s48
    %p52 = pneg %p46
    %p53 = scmp.eq.s32.totalorder %s16, 1
    %p54 = por %p52, %p53
    %p55 = scmp.ne.s32.totalorder %s47, %s50
    %p56 = scmp.eq.s32.totalorder %s16, 0
    %p57 = por %p55, %p56
    %p58 = scmp.ne.s32.totalorder %s47, %s50
    %p59 = scmp.eq.s32.totalorder %s21, 1
    %p60 = por %p58, %p59
    %p61 = scmp.ne.s32.totalorder %s50, %s51
    %p62 = scmp.eq.s32.totalorder %s21, 0
    %p63 = por %p61, %p62
    %p64 = scmp.ne.s32.totalorder %s50, %s51
    %p65 = scmp.eq.s32.totalorder %s22, 1
    %p66 = por %p64, %p65
    %p68 = scmp.ne.s32.totalorder %s51, %s67
    %p69 = scmp.eq.s32.totalorder %s22, 0
    %p70 = por %p68, %p69
    %p71 = scmp.le.s32.totalorder 1, %s16
    %p72 = scmp.lt.s32.totalorder %s16, 3
    %p73 = pnand %p71, %p72
    %p74 = pneg %p73
    // Predicated region
    $region9: #{_lambda_.5} parent=5 // pred_check
      _
    $region10: #{_lambda_.5} parent=5 // pred_check_branch
      %76 = sbr.rel (%p73) target = $region12
    $region11: #{_lambda_.5} parent=5 // pred_region
      %s77 = ssub.s32 %s16, 1
      // Predicated region
      $region13: #{_lambda_.5} parent=11 // pred_check
        %p78 = pneg %p37
      $region14: #{_lambda_.5} parent=11 // pred_check_branch
        %80 = sbr.rel (%p78) target = $region16
      $region15: #{_lambda_.5} parent=11 // pred_region
        _
      $region16: #{_lambda_.5} parent=11 // pred_fallthru
        _
    $region12: #{_lambda_.5} parent=5 // pred_fallthru
      _
    %p81 = scmp.lt.s32.totalorder %s16, 2
    // Predicated region
    $region17: #{_lambda_.5} parent=5 // pred_check
      %p82 = pneg %p81
    $region18: #{_lambda_.5} parent=5 // pred_check_branch
      %84 = sbr.rel (%p82) target = $region20
    $region19: #{_lambda_.5} parent=5 // pred_region
      _
    $region20: #{_lambda_.5} parent=5 // pred_fallthru
      _
    %p85 = scmp.le.s32.totalorder 1, %s16
    %p86 = scmp.lt.s32.totalorder %s16, 3
    %p87 = pnand %p85, %p86
    %p88 = pneg %p87
    // Predicated region
    $region21: #{_lambda_.5} parent=5 // pred_check
      _
    $region22: #{_lambda_.5} parent=5 // pred_check_branch
      %90 = sbr.rel (%p87) target = $region24
    $region23: #{_lambda_.5} parent=5 // pred_region
      %s91 = ssub.s32 %s16, 1
      %p92 = pneg %p37
      %p93 = pneg %p34
      %p94 = pneg %p63
      %p95 = pneg %p60
      %s96 = smul.u32 4, %s21
      %p97 = scmp.lt.s32.totalorder %s96, 7
      %s98 = scalar_select %p97, %s96, 7
      %s99 = smul.addr %s98, 8
      %s100 = scalar_lea.vmem %s2, %s99
      %s101 = smul.u32 4, %s21
      %p102 = scmp.lt.s32.totalorder %s101, 7
      %s103 = scalar_select %p102, %s101, 7
      %s104 = smul.addr %s103, 8
      %s105 = scalar_lea.vmem %s2, %s104
      %s106 = smul.u32 4, %s21
      %s107 = smul.u32 %s21, 32
      %s108 = sld [smem:[#allocation3 + %s107]]
      %s109 = scalar_lea.vmem %s1, %s108
      %v110 = vld [vmem:[%s109] sm:$0x1]
      %vm111 = vcmask 57344
      %112 = vst.msk [vmem:[%s105] sm:$0x1] %vm111, %v110
      %s113 = sadd.s32 %s107, 1
      %s114 = sld [smem:[#allocation3 + %s113]]
      %s115 = scalar_lea.vmem %s1, %s114
      %v116 = vld [vmem:[%s115] sm:$0x1]
      %117 = vst.msk [vmem:[%s105 + $0x1] sm:$0x1] %vm111, %v116
      %s118 = sadd.s32 %s107, 2
      %s119 = sld [smem:[#allocation3 + %s118]]
      %s120 = scalar_lea.vmem %s1, %s119
      %v121 = vld [vmem:[%s120] sm:$0x1]
      %122 = vst.msk [vmem:[%s105 + $0x2] sm:$0x1] %vm111, %v121
      %s123 = sadd.s32 %s107, 3
      %s124 = sld [smem:[#allocation3 + %s123]]
      %s125 = scalar_lea.vmem %s1, %s124
      %v126 = vld [vmem:[%s125] sm:$0x1]
      %127 = vst.msk [vmem:[%s105 + $0x3] sm:$0x1] %vm111, %v126
      %s128 = sadd.s32 %s107, 4
      %s129 = sld [smem:[#allocation3 + %s128]]
      %s130 = scalar_lea.vmem %s1, %s129
      %v131 = vld [vmem:[%s130] sm:$0x1]
      %132 = vst.msk [vmem:[%s105 + $0x4] sm:$0x1] %vm111, %v131
      %s133 = sadd.s32 %s107, 5
      %s134 = sld [smem:[#allocation3 + %s133]]
      %s135 = scalar_lea.vmem %s1, %s134
      %v136 = vld [vmem:[%s135] sm:$0x1]
      %137 = vst.msk [vmem:[%s105 + $0x5] sm:$0x1] %vm111, %v136
      %s138 = sadd.s32 %s107, 6
      %s139 = sld [smem:[#allocation3 + %s138]]
      %s140 = scalar_lea.vmem %s1, %s139
      %v141 = vld [vmem:[%s140] sm:$0x1]
      %142 = vst.msk [vmem:[%s105 + $0x6] sm:$0x1] %vm111, %v141
      %s143 = sadd.s32 %s107, 7
      %s144 = sld [smem:[#allocation3 + %s143]]
      %s145 = scalar_lea.vmem %s1, %s144
      %v146 = vld [vmem:[%s145] sm:$0x1]
      %147 = vst.msk [vmem:[%s105 + $0x7] sm:$0x1] %vm111, %v146
      %s148 = sadd.s32 %s107, 8
      %s149 = sld [smem:[#allocation3 + %s148]]
      %s150 = scalar_lea.vmem %s1, %s149
      %v151 = vld [vmem:[%s150] sm:$0x1]
      %152 = vst.msk [vmem:[%s105 + $0x8] sm:$0x1] %vm111, %v151
      %s153 = sadd.s32 %s107, 9
      %s154 = sld [smem:[#allocation3 + %s153]]
      %s155 = scalar_lea.vmem %s1, %s154
      %v156 = vld [vmem:[%s155] sm:$0x1]
      %157 = vst.msk [vmem:[%s105 + $0x9] sm:$0x1] %vm111, %v156
      %s158 = sadd.s32 %s107, 10
      %s159 = sld [smem:[#allocation3 + %s158]]
      %s160 = scalar_lea.vmem %s1, %s159
      %v161 = vld [vmem:[%s160] sm:$0x1]
      %162 = vst.msk [vmem:[%s105 + $0xa] sm:$0x1] %vm111, %v161
      %s163 = sadd.s32 %s107, 11
      %s164 = sld [smem:[#allocation3 + %s163]]
      %s165 = scalar_lea.vmem %s1, %s164
      %v166 = vld [vmem:[%s165] sm:$0x1]
      %167 = vst.msk [vmem:[%s105 + $0xb] sm:$0x1] %vm111, %v166
      %s168 = sadd.s32 %s107, 12
      %s169 = sld [smem:[#allocation3 + %s168]]
      %s170 = scalar_lea.vmem %s1, %s169
      %v171 = vld [vmem:[%s170] sm:$0x1]
      %172 = vst.msk [vmem:[%s105 + $0xc] sm:$0x1] %vm111, %v171
      %s173 = sadd.s32 %s107, 13
      %s174 = sld [smem:[#allocation3 + %s173]]
      %s175 = scalar_lea.vmem %s1, %s174
      %v176 = vld [vmem:[%s175] sm:$0x1]
      %177 = vst.msk [vmem:[%s105 + $0xd] sm:$0x1] %vm111, %v176
      %s178 = sadd.s32 %s107, 14
      %s179 = sld [smem:[#allocation3 + %s178]]
      %s180 = scalar_lea.vmem %s1, %s179
      %v181 = vld [vmem:[%s180] sm:$0x1]
      %182 = vst.msk [vmem:[%s105 + $0xe] sm:$0x1] %vm111, %v181
      %s183 = sadd.s32 %s107, 15
      %s184 = sld [smem:[#allocation3 + %s183]]
      %s185 = scalar_lea.vmem %s1, %s184
      %v186 = vld [vmem:[%s185] sm:$0x1]
      %187 = vst.msk [vmem:[%s105 + $0xf] sm:$0x1] %vm111, %v186
      %s188 = sadd.s32 %s107, 16
      %s189 = sld [smem:[#allocation3 + %s188]]
      %s190 = scalar_lea.vmem %s1, %s189
      %v191 = vld [vmem:[%s190] sm:$0x1]
      %192 = vst.msk [vmem:[%s105 + $0x10] sm:$0x1] %vm111, %v191
      %s193 = sadd.s32 %s107, 17
      %s194 = sld [smem:[#allocation3 + %s193]]
      %s195 = scalar_lea.vmem %s1, %s194
      %v196 = vld [vmem:[%s195] sm:$0x1]
      %197 = vst.msk [vmem:[%s105 + $0x11] sm:$0x1] %vm111, %v196
      %s198 = sadd.s32 %s107, 18
      %s199 = sld [smem:[#allocation3 + %s198]]
      %s200 = scalar_lea.vmem %s1, %s199
      %v201 = vld [vmem:[%s200] sm:$0x1]
      %202 = vst.msk [vmem:[%s105 + $0x12] sm:$0x1] %vm111, %v201
      %s203 = sadd.s32 %s107, 19
      %s204 = sld [smem:[#allocation3 + %s203]]
      %s205 = scalar_lea.vmem %s1, %s204
      %v206 = vld [vmem:[%s205] sm:$0x1]
      %207 = vst.msk [vmem:[%s105 + $0x13] sm:$0x1] %vm111, %v206
      %s208 = sadd.s32 %s107, 20
      %s209 = sld [smem:[#allocation3 + %s208]]
      %s210 = scalar_lea.vmem %s1, %s209
      %v211 = vld [vmem:[%s210] sm:$0x1]
      %212 = vst.msk [vmem:[%s105 + $0x14] sm:$0x1] %vm111, %v211
      %s213 = sadd.s32 %s107, 21
      %s214 = sld [smem:[#allocation3 + %s213]]
      %s215 = scalar_lea.vmem %s1, %s214
      %v216 = vld [vmem:[%s215] sm:$0x1]
      %217 = vst.msk [vmem:[%s105 + $0x15] sm:$0x1] %vm111, %v216
      %s218 = sadd.s32 %s107, 22
      %s219 = sld [smem:[#allocation3 + %s218]]
      %s220 = scalar_lea.vmem %s1, %s219
      %v221 = vld [vmem:[%s220] sm:$0x1]
      %222 = vst.msk [vmem:[%s105 + $0x16] sm:$0x1] %vm111, %v221
      %s223 = sadd.s32 %s107, 23
      %s224 = sld [smem:[#allocation3 + %s223]]
      %s225 = scalar_lea.vmem %s1, %s224
      %v226 = vld [vmem:[%s225] sm:$0x1]
      %227 = vst.msk [vmem:[%s105 + $0x17] sm:$0x1] %vm111, %v226
      %s228 = sadd.s32 %s107, 24
      %s229 = sld [smem:[#allocation3 + %s228]]
      %s230 = scalar_lea.vmem %s1, %s229
      %v231 = vld [vmem:[%s230] sm:$0x1]
      %232 = vst.msk [vmem:[%s105 + $0x18] sm:$0x1] %vm111, %v231
      %s233 = sadd.s32 %s107, 25
      %s234 = sld [smem:[#allocation3 + %s233]]
      %s235 = scalar_lea.vmem %s1, %s234
      %v236 = vld [vmem:[%s235] sm:$0x1]
      %237 = vst.msk [vmem:[%s105 + $0x19] sm:$0x1] %vm111, %v236
      %s238 = sadd.s32 %s107, 26
      %s239 = sld [smem:[#allocation3 + %s238]]
      %s240 = scalar_lea.vmem %s1, %s239
      %v241 = vld [vmem:[%s240] sm:$0x1]
      %242 = vst.msk [vmem:[%s105 + $0x1a] sm:$0x1] %vm111, %v241
      %s243 = sadd.s32 %s107, 27
      %s244 = sld [smem:[#allocation3 + %s243]]
      %s245 = scalar_lea.vmem %s1, %s244
      %v246 = vld [vmem:[%s245] sm:$0x1]
      %247 = vst.msk [vmem:[%s105 + $0x1b] sm:$0x1] %vm111, %v246
      %s248 = sadd.s32 %s107, 28
      %s249 = sld [smem:[#allocation3 + %s248]]
      %s250 = scalar_lea.vmem %s1, %s249
      %v251 = vld [vmem:[%s250] sm:$0x1]
      %252 = vst.msk [vmem:[%s105 + $0x1c] sm:$0x1] %vm111, %v251
      %s253 = sadd.s32 %s107, 29
      %s254 = sld [smem:[#allocation3 + %s253]]
      %s255 = scalar_lea.vmem %s1, %s254
      %v256 = vld [vmem:[%s255] sm:$0x1]
      %257 = vst.msk [vmem:[%s105 + $0x1d] sm:$0x1] %vm111, %v256
      %s258 = sadd.s32 %s107, 30
      %s259 = sld [smem:[#allocation3 + %s258]]
      %s260 = scalar_lea.vmem %s1, %s259
      %v261 = vld [vmem:[%s260] sm:$0x1]
      %262 = vst.msk [vmem:[%s105 + $0x1e] sm:$0x1] %vm111, %v261
      %s263 = sadd.s32 %s107, 31
      %s264 = sld [smem:[#allocation3 + %s263]]
      %s265 = scalar_lea.vmem %s1, %s264
      %v266 = vld [vmem:[%s265] sm:$0x1]
      %267 = vst.msk [vmem:[%s105 + $0x1f] sm:$0x1] %vm111, %v266
      %v268 = vld [vmem:[%s105] sm:$0xff]
      %v269 = vld [vmem:[%s105 + $0x8] sm:$0xff]
      %v270 = vld [vmem:[%s105 + $0x10] sm:$0xff]
      %v271 = vld [vmem:[%s105 + $0x18] sm:$0xff]
      %v272 = vmul.f32 %v268, %v268
      %v273 = vmul.f32 %v269, %v269
      %v274 = vmul.f32 %v270, %v270
      %v275 = vmul.f32 %v271, %v271
      %vm276 = vcmask 64512
      %v277 = vsel %vm276, %v272, 0.0
      %278 = vadd.xlane.f32.xlu0 %v277
      %v279 = vpop.xlane.xlu0 %278
      %v280 = vsel %vm276, %v273, 0.0
      %281 = vadd.xlane.f32.xlu0 %v280
      %v282 = vpop.xlane.xlu0 %281
      %v283 = vsel %vm276, %v274, 0.0
      %284 = vadd.xlane.f32.xlu0 %v283
      %v285 = vpop.xlane.xlu0 %284
      %v286 = vsel %vm276, %v275, 0.0
      %287 = vadd.xlane.f32.xlu0 %v286
      %v288 = vpop.xlane.xlu0 %287
      %v289 = vrsqrt.pop %v279
      %v290 = vmul.f32 %v289, %v279
      %v291 = vmul.f32 %v290, %v289
      %v292 = vmul.f32 0.5, %v291
      %v293 = vsub.f32 1.5, %v292
      %v294 = vmul.f32 %v289, %v293
      %v295 = vmul.f32 %v279, %v294
      %vm296 = vcmp.eq.f32.partialorder %v279, inf
      %v297 = vsel %vm296, %v279, %v295
      %vm298 = vcmp.eq.f32.partialorder %v279, 0.0
      %v299 = vand.u32 %v279, 2147483648
      %v300 = vsel %vm298, %v299, %v297
      %v301 = vrsqrt.pop %v282
      %v302 = vmul.f32 %v301, %v282
      %v303 = vmul.f32 %v302, %v301
      %v304 = vmul.f32 0.5, %v303
      %v305 = vsub.f32 1.5, %v304
      %v306 = vmul.f32 %v301, %v305
      %v307 = vmul.f32 %v282, %v306
      %vm308 = vcmp.eq.f32.partialorder %v282, inf
      %v309 = vsel %vm308, %v282, %v307
      %vm310 = vcmp.eq.f32.partialorder %v282, 0.0
      %v311 = vand.u32 %v282, 2147483648
      %v312 = vsel %vm310, %v311, %v309
      %v313 = vrsqrt.pop %v285
      %v314 = vmul.f32 %v313, %v285
      %v315 = vmul.f32 %v314, %v313
      %v316 = vmul.f32 0.5, %v315
      %v317 = vsub.f32 1.5, %v316
      %v318 = vmul.f32 %v313, %v317
      %v319 = vmul.f32 %v285, %v318
      %vm320 = vcmp.eq.f32.partialorder %v285, inf
      %v321 = vsel %vm320, %v285, %v319
      %vm322 = vcmp.eq.f32.partialorder %v285, 0.0
      %v323 = vand.u32 %v285, 2147483648
      %v324 = vsel %vm322, %v323, %v321
      %v325 = vrsqrt.pop %v288
      %v326 = vmul.f32 %v325, %v288
      %v327 = vmul.f32 %v326, %v325
      %v328 = vmul.f32 0.5, %v327
      %v329 = vsub.f32 1.5, %v328
      %v330 = vmul.f32 %v325, %v329
      %v331 = vmul.f32 %v288, %v330
      %vm332 = vcmp.eq.f32.partialorder %v288, inf
      %v333 = vsel %vm332, %v288, %v331
      %vm334 = vcmp.eq.f32.partialorder %v288, 0.0
      %v335 = vand.u32 %v288, 2147483648
      %v336 = vsel %vm334, %v335, %v333
      %v337 = vadd.f32 %v300, 1e-07
      %v338 = vadd.f32 %v312, 1e-07
      %v339 = vadd.f32 %v324, 1e-07
      %v340 = vadd.f32 %v336, 1e-07
      %v341 = vrcp.pop %v337
      %v342 = vmul.f32 %v337, %v341
      %v343 = vsub.f32 1.0, %v342
      %v344 = vmul.f32 %v341, %v343
      %v345 = vadd.f32 %v341, %v344
      %vm346 = vweird.f32 %v337
      %vm347 = vweird.f32 %v341
      %vm348 = vmor %vm346, %vm347
      %v349 = vsel %vm348, %v341, %v345
      %v350 = vand.u32 2147483647, %v337
      %vm351 = vcmp.eq.f32.partialorder %v350, 8.507059e+37
      %v352 = vand.u32 %v337, 2147483648
      %v353 = vor.u32 1.1754944e-38, %v352
      %v354 = vsel %vm351, %v353, %v349
      %v355 = vrcp.pop %v338
      %v356 = vmul.f32 %v338, %v355
      %v357 = vsub.f32 1.0, %v356
      %v358 = vmul.f32 %v355, %v357
      %v359 = vadd.f32 %v355, %v358
      %vm360 = vweird.f32 %v338
      %vm361 = vweird.f32 %v355
      %vm362 = vmor %vm360, %vm361
      %v363 = vsel %vm362, %v355, %v359
      %v364 = vand.u32 2147483647, %v338
      %vm365 = vcmp.eq.f32.partialorder %v364, 8.507059e+37
      %v366 = vand.u32 %v338, 2147483648
      %v367 = vor.u32 1.1754944e-38, %v366
      %v368 = vsel %vm365, %v367, %v363
      %v369 = vrcp.pop %v339
      %v370 = vmul.f32 %v339, %v369
      %v371 = vsub.f32 1.0, %v370
      %v372 = vmul.f32 %v369, %v371
      %v373 = vadd.f32 %v369, %v372
      %vm374 = vweird.f32 %v339
      %vm375 = vweird.f32 %v369
      %vm376 = vmor %vm374, %vm375
      %v377 = vsel %vm376, %v369, %v373
      %v378 = vand.u32 2147483647, %v339
      %vm379 = vcmp.eq.f32.partialorder %v378, 8.507059e+37
      %v380 = vand.u32 %v339, 2147483648
      %v381 = vor.u32 1.1754944e-38, %v380
      %v382 = vsel %vm379, %v381, %v377
      %v383 = vrcp.pop %v340
      %v384 = vmul.f32 %v340, %v383
      %v385 = vsub.f32 1.0, %v384
      %v386 = vmul.f32 %v383, %v385
      %v387 = vadd.f32 %v383, %v386
      %vm388 = vweird.f32 %v340
      %vm389 = vweird.f32 %v383
      %vm390 = vmor %vm388, %vm389
      %v391 = vsel %vm390, %v383, %v387
      %v392 = vand.u32 2147483647, %v340
      %vm393 = vcmp.eq.f32.partialorder %v392, 8.507059e+37
      %v394 = vand.u32 %v340, 2147483648
      %v395 = vor.u32 1.1754944e-38, %v394
      %v396 = vsel %vm393, %v395, %v391
      %v397 = vmul.f32 %v268, %v354
      %v398 = vmul.f32 %v269, %v368
      %v399 = vmul.f32 %v270, %v382
      %v400 = vmul.f32 %v271, %v396
      %401 = vst.msk [vmem:[%s105] sm:$0xff] %vm276, %v397
      %402 = vst.msk [vmem:[%s105 + $0x8] sm:$0xff] %vm276, %v398
      %403 = vst.msk [vmem:[%s105 + $0x10] sm:$0xff] %vm276, %v399
      %404 = vst.msk [vmem:[%s105 + $0x18] sm:$0xff] %vm276, %v400
      %s405 = smul.u32 4, %s21
      %p406 = scmp.lt.s32.totalorder %s405, 7
      %s407 = scalar_select %p406, %s405, 7
      %s408 = smul.addr %s407, 8
      %s409 = scalar_lea.vmem %s2, %s408
      // Predicated region
      $region25: #{_lambda_.5} parent=23 // pred_check
        %p410 = pneg %p60
      $region26: #{_lambda_.5} parent=23 // pred_check_branch
        %412 = sbr.rel (%p410) target = $region28
      $region27: #{_lambda_.5} parent=23 // pred_region
        %s413 = smul.u32 4, %s21
      $region28: #{_lambda_.5} parent=23 // pred_fallthru
        _
    $region24: #{_lambda_.5} parent=5 // pred_fallthru
      _
    %p414 = scmp.le.s32.totalorder 2, %s16
    // Predicated region
    $region29: #{_lambda_.5} parent=5 // pred_check
      %p415 = pneg %p414
    $region30: #{_lambda_.5} parent=5 // pred_check_branch
      %417 = sbr.rel (%p415) target = $region32
    $region31: #{_lambda_.5} parent=5 // pred_region
      %s418 = ssub.s32 %s16, 2
      // Predicated region
      $region33: #{_lambda_.5} parent=31 // pred_check
        %p419 = pneg %p66
      $region34: #{_lambda_.5} parent=31 // pred_check_branch
        %421 = sbr.rel (%p419) target = $region36
      $region35: #{_lambda_.5} parent=31 // pred_region
        %s422 = smul.u32 4, %s22
        %p423 = scmp.lt.s32.totalorder %s422, 7
        %s424 = scalar_select %p423, %s422, 7
        %s425 = smul.addr %s424, 8
        %s426 = scalar_lea.vmem %s2, %s425
      $region36: #{_lambda_.5} parent=31 // pred_fallthru
        _
    $region32: #{_lambda_.5} parent=5 // pred_fallthru
      _
  $region6: #{_lambda_.5} parent=0 // loop_footer
    %s20 = sadd.s32 1, %s16
  $region7: #{_lambda_.5} parent=0 // loop_footer_branch
    %15 = sbr.rel target = $region3
  $region8: #{_lambda_.5} parent=0 // loop_exit
    _

// kernel: _lambda_.4
$region0: #{_lambda_.4}
  #allocation0 [shape = 'u32[]', space=smem, size = 0x4, offset = 0x4, fixed_abs, tag = 'smem constant byte address 0x4 - core index']
  #allocation1 [shape = 'u32[72,128]{1,0:T(1,128)}', space=vmem, size = 0x9000, scoped, tag = 'internal scratch']
  #allocation2 [shape = 's32[1]{0}', space=sflag, size = 0x4, scoped, tag = 'scoped memory for _lambda_.4']
  #allocation3 [shape = 'u8[512]{0}', space=smem, size = 0x200, scoped, tag = 'prefetched SMEM operand 0']
  %s0 = inlined_call_operand.vmem [shape: s32[64], index: 0, kind: input, shape index: {}]
  %s1 = inlined_call_operand.vmem [shape: f32[1024,32], index: 1, kind: input, shape index: {}]
  %s2 = inlined_call_operand.vmem [shape: f32[64,32], index: 2, kind: output, shape index: {}]
  %s3 = sld [smem:[#allocation0]]
  $region37: #{_lambda_.4} parent=0
    _
  %s5 = ssub.s32 1, %s3
  %s6 = scalar_select 0, %s5, %s3
  %s8 = sshll.u32 %s0, 4
  %s9 = int_to_ptr.vmem [resolvable:$true] %s8
  %11 = dma.vmem_to_smem %s9, 16, [#allocation3], [#allocation2]
  %13 = dma.done [#allocation2], 16
  %14 = sfence
  loop: start=0, step=1, limit=4
  $region2: #{_lambda_.4} parent=0 // loop_pre_header
    _
  $region3: #{_lambda_.4} parent=0 // loop_header
    %s16 = sphi 0, %s20
    %p17 = scmp.ge.s32.totalorder %s16, 4
    %s24 = sphi 0, %s24
    %s26 = sphi 0, %s24
    %s27 = sphi 0, %s26
    %s41 = sphi 0, %s27
    %s47 = sphi 0, %s49
    %s50 = sphi 0, %s47
    %s51 = sphi 0, %s50
    %s67 = sphi 0, %s51
  $region4: #{_lambda_.4} parent=0 // loop_header_branch
    %19 = sbr.rel (%p17) target = $region8
  $region5: #{_lambda_.4} parent=0 // loop_body
    %s21 = ssub.s32 %s16, 1
    %s22 = ssub.s32 %s16, 2
    %s23 = sadd.s32 %s16, 1
    %s25 = sadd.s32 %s24, 1
    %p28 = scmp.eq.s32.totalorder %s16, 1
    %p29 = scmp.ne.s32.totalorder %s24, %s26
    %p30 = scmp.eq.s32.totalorder %s16, 0
    %p31 = por %p29, %p30
    %p32 = scmp.ne.s32.totalorder %s24, %s26
    %p33 = scmp.eq.s32.totalorder %s21, 1
    %p34 = por %p32, %p33
    %p35 = scmp.ne.s32.totalorder %s26, %s27
    %p36 = scmp.eq.s32.totalorder %s21, 0
    %p37 = por %p35, %p36
    %p38 = scmp.ne.s32.totalorder %s26, %s27
    %p39 = scmp.eq.s32.totalorder %s22, 1
    %p40 = por %p38, %p39
    %p42 = scmp.ne.s32.totalorder %s27, %s41
    %p43 = scmp.eq.s32.totalorder %s22, 0
    %p44 = por %p42, %p43
    %s45 = ssub.s32 %s16, %s23
    %p46 = scmp.eq.s32.totalorder %s45, 0
    %s48 = sadd.s32 %s47, 1
    %s49 = scalar_select %p46, %s47, %s48
    %p52 = pneg %p46
    %p53 = scmp.eq.s32.totalorder %s16, 1
    %p54 = por %p52, %p53
    %p55 = scmp.ne.s32.totalorder %s47, %s50
    %p56 = scmp.eq.s32.totalorder %s16, 0
    %p57 = por %p55, %p56
    %p58 = scmp.ne.s32.totalorder %s47, %s50
    %p59 = scmp.eq.s32.totalorder %s21, 1
    %p60 = por %p58, %p59
    %p61 = scmp.ne.s32.totalorder %s50, %s51
    %p62 = scmp.eq.s32.totalorder %s21, 0
    %p63 = por %p61, %p62
    %p64 = scmp.ne.s32.totalorder %s50, %s51
    %p65 = scmp.eq.s32.totalorder %s22, 1
    %p66 = por %p64, %p65
    %p68 = scmp.ne.s32.totalorder %s51, %s67
    %p69 = scmp.eq.s32.totalorder %s22, 0
    %p70 = por %p68, %p69
    %p71 = scmp.le.s32.totalorder 1, %s16
    %p72 = scmp.lt.s32.totalorder %s16, 3
    %p73 = pnand %p71, %p72
    %p74 = pneg %p73
    // Predicated region
    $region9: #{_lambda_.4} parent=5 // pred_check
      _
    $region10: #{_lambda_.4} parent=5 // pred_check_branch
      %76 = sbr.rel (%p73) target = $region12
    $region11: #{_lambda_.4} parent=5 // pred_region
      %s77 = ssub.s32 %s16, 1
      // Predicated region
      $region13: #{_lambda_.4} parent=11 // pred_check
        %p78 = pneg %p37
      $region14: #{_lambda_.4} parent=11 // pred_check_branch
        %80 = sbr.rel (%p78) target = $region16
      $region15: #{_lambda_.4} parent=11 // pred_region
        _
      $region16: #{_lambda_.4} parent=11 // pred_fallthru
        _
    $region12: #{_lambda_.4} parent=5 // pred_fallthru
      _
    %p81 = scmp.lt.s32.totalorder %s16, 2
    // Predicated region
    $region17: #{_lambda_.4} parent=5 // pred_check
      %p82 = pneg %p81
    $region18: #{_lambda_.4} parent=5 // pred_check_branch
      %84 = sbr.rel (%p82) target = $region20
    $region19: #{_lambda_.4} parent=5 // pred_region
      _
    $region20: #{_lambda_.4} parent=5 // pred_fallthru
      _
    %p85 = scmp.le.s32.totalorder 1, %s16
    %p86 = scmp.lt.s32.totalorder %s16, 3
    %p87 = pnand %p85, %p86
    %p88 = pneg %p87
    // Predicated region
    $region21: #{_lambda_.4} parent=5 // pred_check
      _
    $region22: #{_lambda_.4} parent=5 // pred_check_branch
      %90 = sbr.rel (%p87) target = $region24
    $region23: #{_lambda_.4} parent=5 // pred_region
      %s91 = ssub.s32 %s16, 1
      %p92 = pneg %p37
      %p93 = pneg %p34
      %p94 = pneg %p63
      %p95 = pneg %p60
      %s96 = smul.u32 4, %s21
      %p97 = scmp.lt.s32.totalorder %s96, 7
      %s98 = scalar_select %p97, %s96, 7
      %s99 = smul.addr %s98, 8
      %s100 = scalar_lea.vmem %s2, %s99
      %s101 = smul.u32 4, %s21
      %p102 = scmp.lt.s32.totalorder %s101, 7
      %s103 = scalar_select %p102, %s101, 7
      %s104 = smul.addr %s103, 8
      %s105 = scalar_lea.vmem %s2, %s104
      %s106 = smul.u32 4, %s21
      %s107 = smul.u32 %s21, 32
      %s108 = sld [smem:[#allocation3 + %s107]]
      %s109 = scalar_lea.vmem %s1, %s108
      %v110 = vld [vmem:[%s109] sm:$0x1]
      %vm111 = vcmask 253952
      %112 = vst.msk [vmem:[%s105] sm:$0x1] %vm111, %v110
      %s113 = sadd.s32 %s107, 1
      %s114 = sld [smem:[#allocation3 + %s113]]
      %s115 = scalar_lea.vmem %s1, %s114
      %v116 = vld [vmem:[%s115] sm:$0x1]
      %117 = vst.msk [vmem:[%s105 + $0x1] sm:$0x1] %vm111, %v116
      %s118 = sadd.s32 %s107, 2
      %s119 = sld [smem:[#allocation3 + %s118]]
      %s120 = scalar_lea.vmem %s1, %s119
      %v121 = vld [vmem:[%s120] sm:$0x1]
      %122 = vst.msk [vmem:[%s105 + $0x2] sm:$0x1] %vm111, %v121
      %s123 = sadd.s32 %s107, 3
      %s124 = sld [smem:[#allocation3 + %s123]]
      %s125 = scalar_lea.vmem %s1, %s124
      %v126 = vld [vmem:[%s125] sm:$0x1]
      %127 = vst.msk [vmem:[%s105 + $0x3] sm:$0x1] %vm111, %v126
      %s128 = sadd.s32 %s107, 4
      %s129 = sld [smem:[#allocation3 + %s128]]
      %s130 = scalar_lea.vmem %s1, %s129
      %v131 = vld [vmem:[%s130] sm:$0x1]
      %132 = vst.msk [vmem:[%s105 + $0x4] sm:$0x1] %vm111, %v131
      %s133 = sadd.s32 %s107, 5
      %s134 = sld [smem:[#allocation3 + %s133]]
      %s135 = scalar_lea.vmem %s1, %s134
      %v136 = vld [vmem:[%s135] sm:$0x1]
      %137 = vst.msk [vmem:[%s105 + $0x5] sm:$0x1] %vm111, %v136
      %s138 = sadd.s32 %s107, 6
      %s139 = sld [smem:[#allocation3 + %s138]]
      %s140 = scalar_lea.vmem %s1, %s139
      %v141 = vld [vmem:[%s140] sm:$0x1]
      %142 = vst.msk [vmem:[%s105 + $0x6] sm:$0x1] %vm111, %v141
      %s143 = sadd.s32 %s107, 7
      %s144 = sld [smem:[#allocation3 + %s143]]
      %s145 = scalar_lea.vmem %s1, %s144
      %v146 = vld [vmem:[%s145] sm:$0x1]
      %147 = vst.msk [vmem:[%s105 + $0x7] sm:$0x1] %vm111, %v146
      %s148 = sadd.s32 %s107, 8
      %s149 = sld [smem:[#allocation3 + %s148]]
      %s150 = scalar_lea.vmem %s1, %s149
      %v151 = vld [vmem:[%s150] sm:$0x1]
      %152 = vst.msk [vmem:[%s105 + $0x8] sm:$0x1] %vm111, %v151
      %s153 = sadd.s32 %s107, 9
      %s154 = sld [smem:[#allocation3 + %s153]]
      %s155 = scalar_lea.vmem %s1, %s154
      %v156 = vld [vmem:[%s155] sm:$0x1]
      %157 = vst.msk [vmem:[%s105 + $0x9] sm:$0x1] %vm111, %v156
      %s158 = sadd.s32 %s107, 10
      %s159 = sld [smem:[#allocation3 + %s158]]
      %s160 = scalar_lea.vmem %s1, %s159
      %v161 = vld [vmem:[%s160] sm:$0x1]
      %162 = vst.msk [vmem:[%s105 + $0xa] sm:$0x1] %vm111, %v161
      %s163 = sadd.s32 %s107, 11
      %s164 = sld [smem:[#allocation3 + %s163]]
      %s165 = scalar_lea.vmem %s1, %s164
      %v166 = vld [vmem:[%s165] sm:$0x1]
      %167 = vst.msk [vmem:[%s105 + $0xb] sm:$0x1] %vm111, %v166
      %s168 = sadd.s32 %s107, 12
      %s169 = sld [smem:[#allocation3 + %s168]]
      %s170 = scalar_lea.vmem %s1, %s169
      %v171 = vld [vmem:[%s170] sm:$0x1]
      %172 = vst.msk [vmem:[%s105 + $0xc] sm:$0x1] %vm111, %v171
      %s173 = sadd.s32 %s107, 13
      %s174 = sld [smem:[#allocation3 + %s173]]
      %s175 = scalar_lea.vmem %s1, %s174
      %v176 = vld [vmem:[%s175] sm:$0x1]
      %177 = vst.msk [vmem:[%s105 + $0xd] sm:$0x1] %vm111, %v176
      %s178 = sadd.s32 %s107, 14
      %s179 = sld [smem:[#allocation3 + %s178]]
      %s180 = scalar_lea.vmem %s1, %s179
      %v181 = vld [vmem:[%s180] sm:$0x1]
      %182 = vst.msk [vmem:[%s105 + $0xe] sm:$0x1] %vm111, %v181
      %s183 = sadd.s32 %s107, 15
      %s184 = sld [smem:[#allocation3 + %s183]]
      %s185 = scalar_lea.vmem %s1, %s184
      %v186 = vld [vmem:[%s185] sm:$0x1]
      %187 = vst.msk [vmem:[%s105 + $0xf] sm:$0x1] %vm111, %v186
      %s188 = sadd.s32 %s107, 16
      %s189 = sld [smem:[#allocation3 + %s188]]
      %s190 = scalar_lea.vmem %s1, %s189
      %v191 = vld [vmem:[%s190] sm:$0x1]
      %192 = vst.msk [vmem:[%s105 + $0x10] sm:$0x1] %vm111, %v191
      %s193 = sadd.s32 %s107, 17
      %s194 = sld [smem:[#allocation3 + %s193]]
      %s195 = scalar_lea.vmem %s1, %s194
      %v196 = vld [vmem:[%s195] sm:$0x1]
      %197 = vst.msk [vmem:[%s105 + $0x11] sm:$0x1] %vm111, %v196
      %s198 = sadd.s32 %s107, 18
      %s199 = sld [smem:[#allocation3 + %s198]]
      %s200 = scalar_lea.vmem %s1, %s199
      %v201 = vld [vmem:[%s200] sm:$0x1]
      %202 = vst.msk [vmem:[%s105 + $0x12] sm:$0x1] %vm111, %v201
      %s203 = sadd.s32 %s107, 19
      %s204 = sld [smem:[#allocation3 + %s203]]
      %s205 = scalar_lea.vmem %s1, %s204
      %v206 = vld [vmem:[%s205] sm:$0x1]
      %207 = vst.msk [vmem:[%s105 + $0x13] sm:$0x1] %vm111, %v206
      %s208 = sadd.s32 %s107, 20
      %s209 = sld [smem:[#allocation3 + %s208]]
      %s210 = scalar_lea.vmem %s1, %s209
      %v211 = vld [vmem:[%s210] sm:$0x1]
      %212 = vst.msk [vmem:[%s105 + $0x14] sm:$0x1] %vm111, %v211
      %s213 = sadd.s32 %s107, 21
      %s214 = sld [smem:[#allocation3 + %s213]]
      %s215 = scalar_lea.vmem %s1, %s214
      %v216 = vld [vmem:[%s215] sm:$0x1]
      %217 = vst.msk [vmem:[%s105 + $0x15] sm:$0x1] %vm111, %v216
      %s218 = sadd.s32 %s107, 22
      %s219 = sld [smem:[#allocation3 + %s218]]
      %s220 = scalar_lea.vmem %s1, %s219
      %v221 = vld [vmem:[%s220] sm:$0x1]
      %222 = vst.msk [vmem:[%s105 + $0x16] sm:$0x1] %vm111, %v221
      %s223 = sadd.s32 %s107, 23
      %s224 = sld [smem:[#allocation3 + %s223]]
      %s225 = scalar_lea.vmem %s1, %s224
      %v226 = vld [vmem:[%s225] sm:$0x1]
      %227 = vst.msk [vmem:[%s105 + $0x17] sm:$0x1] %vm111, %v226
      %s228 = sadd.s32 %s107, 24
      %s229 = sld [smem:[#allocation3 + %s228]]
      %s230 = scalar_lea.vmem %s1, %s229
      %v231 = vld [vmem:[%s230] sm:$0x1]
      %232 = vst.msk [vmem:[%s105 + $0x18] sm:$0x1] %vm111, %v231
      %s233 = sadd.s32 %s107, 25
      %s234 = sld [smem:[#allocation3 + %s233]]
      %s235 = scalar_lea.vmem %s1, %s234
      %v236 = vld [vmem:[%s235] sm:$0x1]
      %237 = vst.msk [vmem:[%s105 + $0x19] sm:$0x1] %vm111, %v236
      %s238 = sadd.s32 %s107, 26
      %s239 = sld [smem:[#allocation3 + %s238]]
      %s240 = scalar_lea.vmem %s1, %s239
      %v241 = vld [vmem:[%s240] sm:$0x1]
      %242 = vst.msk [vmem:[%s105 + $0x1a] sm:$0x1] %vm111, %v241
      %s243 = sadd.s32 %s107, 27
      %s244 = sld [smem:[#allocation3 + %s243]]
      %s245 = scalar_lea.vmem %s1, %s244
      %v246 = vld [vmem:[%s245] sm:$0x1]
      %247 = vst.msk [vmem:[%s105 + $0x1b] sm:$0x1] %vm111, %v246
      %s248 = sadd.s32 %s107, 28
      %s249 = sld [smem:[#allocation3 + %s248]]
      %s250 = scalar_lea.vmem %s1, %s249
      %v251 = vld [vmem:[%s250] sm:$0x1]
      %252 = vst.msk [vmem:[%s105 + $0x1c] sm:$0x1] %vm111, %v251
      %s253 = sadd.s32 %s107, 29
      %s254 = sld [smem:[#allocation3 + %s253]]
      %s255 = scalar_lea.vmem %s1, %s254
      %v256 = vld [vmem:[%s255] sm:$0x1]
      %257 = vst.msk [vmem:[%s105 + $0x1d] sm:$0x1] %vm111, %v256
      %s258 = sadd.s32 %s107, 30
      %s259 = sld [smem:[#allocation3 + %s258]]
      %s260 = scalar_lea.vmem %s1, %s259
      %v261 = vld [vmem:[%s260] sm:$0x1]
      %262 = vst.msk [vmem:[%s105 + $0x1e] sm:$0x1] %vm111, %v261
      %s263 = sadd.s32 %s107, 31
      %s264 = sld [smem:[#allocation3 + %s263]]
      %s265 = scalar_lea.vmem %s1, %s264
      %v266 = vld [vmem:[%s265] sm:$0x1]
      %267 = vst.msk [vmem:[%s105 + $0x1f] sm:$0x1] %vm111, %v266
      %v268 = vld [vmem:[%s105] sm:$0xff]
      %v269 = vld [vmem:[%s105 + $0x8] sm:$0xff]
      %v270 = vld [vmem:[%s105 + $0x10] sm:$0xff]
      %v271 = vld [vmem:[%s105 + $0x18] sm:$0xff]
      %v272 = vmul.f32 %v268, %v268
      %v273 = vmul.f32 %v269, %v269
      %v274 = vmul.f32 %v270, %v270
      %v275 = vmul.f32 %v271, %v271
      %vm276 = vcmask 261120
      %v277 = vsel %vm276, %v272, 0.0
      %278 = vadd.xlane.f32.xlu0 %v277
      %v279 = vpop.xlane.xlu0 %278
      %v280 = vsel %vm276, %v273, 0.0
      %281 = vadd.xlane.f32.xlu0 %v280
      %v282 = vpop.xlane.xlu0 %281
      %v283 = vsel %vm276, %v274, 0.0
      %284 = vadd.xlane.f32.xlu0 %v283
      %v285 = vpop.xlane.xlu0 %284
      %v286 = vsel %vm276, %v275, 0.0
      %287 = vadd.xlane.f32.xlu0 %v286
      %v288 = vpop.xlane.xlu0 %287
      %v289 = vrsqrt.pop %v279
      %v290 = vmul.f32 %v289, %v279
      %v291 = vmul.f32 %v290, %v289
      %v292 = vmul.f32 0.5, %v291
      %v293 = vsub.f32 1.5, %v292
      %v294 = vmul.f32 %v289, %v293
      %v295 = vmul.f32 %v279, %v294
      %vm296 = vcmp.eq.f32.partialorder %v279, inf
      %v297 = vsel %vm296, %v279, %v295
      %vm298 = vcmp.eq.f32.partialorder %v279, 0.0
      %v299 = vand.u32 %v279, 2147483648
      %v300 = vsel %vm298, %v299, %v297
      %v301 = vrsqrt.pop %v282
      %v302 = vmul.f32 %v301, %v282
      %v303 = vmul.f32 %v302, %v301
      %v304 = vmul.f32 0.5, %v303
      %v305 = vsub.f32 1.5, %v304
      %v306 = vmul.f32 %v301, %v305
      %v307 = vmul.f32 %v282, %v306
      %vm308 = vcmp.eq.f32.partialorder %v282, inf
      %v309 = vsel %vm308, %v282, %v307
      %vm310 = vcmp.eq.f32.partialorder %v282, 0.0
      %v311 = vand.u32 %v282, 2147483648
      %v312 = vsel %vm310, %v311, %v309
      %v313 = vrsqrt.pop %v285
      %v314 = vmul.f32 %v313, %v285
      %v315 = vmul.f32 %v314, %v313
      %v316 = vmul.f32 0.5, %v315
      %v317 = vsub.f32 1.5, %v316
      %v318 = vmul.f32 %v313, %v317
      %v319 = vmul.f32 %v285, %v318
      %vm320 = vcmp.eq.f32.partialorder %v285, inf
      %v321 = vsel %vm320, %v285, %v319
      %vm322 = vcmp.eq.f32.partialorder %v285, 0.0
      %v323 = vand.u32 %v285, 2147483648
      %v324 = vsel %vm322, %v323, %v321
      %v325 = vrsqrt.pop %v288
      %v326 = vmul.f32 %v325, %v288
      %v327 = vmul.f32 %v326, %v325
      %v328 = vmul.f32 0.5, %v327
      %v329 = vsub.f32 1.5, %v328
      %v330 = vmul.f32 %v325, %v329
      %v331 = vmul.f32 %v288, %v330
      %vm332 = vcmp.eq.f32.partialorder %v288, inf
      %v333 = vsel %vm332, %v288, %v331
      %vm334 = vcmp.eq.f32.partialorder %v288, 0.0
      %v335 = vand.u32 %v288, 2147483648
      %v336 = vsel %vm334, %v335, %v333
      %v337 = vadd.f32 %v300, 1e-07
      %v338 = vadd.f32 %v312, 1e-07
      %v339 = vadd.f32 %v324, 1e-07
      %v340 = vadd.f32 %v336, 1e-07
      %v341 = vrcp.pop %v337
      %v342 = vmul.f32 %v337, %v341
      %v343 = vsub.f32 1.0, %v342
      %v344 = vmul.f32 %v341, %v343
      %v345 = vadd.f32 %v341, %v344
      %vm346 = vweird.f32 %v337
      %vm347 = vweird.f32 %v341
      %vm348 = vmor %vm346, %vm347
      %v349 = vsel %vm348, %v341, %v345
      %v350 = vand.u32 2147483647, %v337
      %vm351 = vcmp.eq.f32.partialorder %v350, 8.507059e+37
      %v352 = vand.u32 %v337, 2147483648
      %v353 = vor.u32 1.1754944e-38, %v352
      %v354 = vsel %vm351, %v353, %v349
      %v355 = vrcp.pop %v338
      %v356 = vmul.f32 %v338, %v355
      %v357 = vsub.f32 1.0, %v356
      %v358 = vmul.f32 %v355, %v357
      %v359 = vadd.f32 %v355, %v358
      %vm360 = vweird.f32 %v338
      %vm361 = vweird.f32 %v355
      %vm362 = vmor %vm360, %vm361
      %v363 = vsel %vm362, %v355, %v359
      %v364 = vand.u32 2147483647, %v338
      %vm365 = vcmp.eq.f32.partialorder %v364, 8.507059e+37
      %v366 = vand.u32 %v338, 2147483648
      %v367 = vor.u32 1.1754944e-38, %v366
      %v368 = vsel %vm365, %v367, %v363
      %v369 = vrcp.pop %v339
      %v370 = vmul.f32 %v339, %v369
      %v371 = vsub.f32 1.0, %v370
      %v372 = vmul.f32 %v369, %v371
      %v373 = vadd.f32 %v369, %v372
      %vm374 = vweird.f32 %v339
      %vm375 = vweird.f32 %v369
      %vm376 = vmor %vm374, %vm375
      %v377 = vsel %vm376, %v369, %v373
      %v378 = vand.u32 2147483647, %v339
      %vm379 = vcmp.eq.f32.partialorder %v378, 8.507059e+37
      %v380 = vand.u32 %v339, 2147483648
      %v381 = vor.u32 1.1754944e-38, %v380
      %v382 = vsel %vm379, %v381, %v377
      %v383 = vrcp.pop %v340
      %v384 = vmul.f32 %v340, %v383
      %v385 = vsub.f32 1.0, %v384
      %v386 = vmul.f32 %v383, %v385
      %v387 = vadd.f32 %v383, %v386
      %vm388 = vweird.f32 %v340
      %vm389 = vweird.f32 %v383
      %vm390 = vmor %vm388, %vm389
      %v391 = vsel %vm390, %v383, %v387
      %v392 = vand.u32 2147483647, %v340
      %vm393 = vcmp.eq.f32.partialorder %v392, 8.507059e+37
      %v394 = vand.u32 %v340, 2147483648
      %v395 = vor.u32 1.1754944e-38, %v394
      %v396 = vsel %vm393, %v395, %v391
      %v397 = vmul.f32 %v268, %v354
      %v398 = vmul.f32 %v269, %v368
      %v399 = vmul.f32 %v270, %v382
      %v400 = vmul.f32 %v271, %v396
      %401 = vst.msk [vmem:[%s105] sm:$0xff] %vm276, %v397
      %402 = vst.msk [vmem:[%s105 + $0x8] sm:$0xff] %vm276, %v398
      %403 = vst.msk [vmem:[%s105 + $0x10] sm:$0xff] %vm276, %v399
      %404 = vst.msk [vmem:[%s105 + $0x18] sm:$0xff] %vm276, %v400
      %s405 = smul.u32 4, %s21
      %p406 = scmp.lt.s32.totalorder %s405, 7
      %s407 = scalar_select %p406, %s405, 7
      %s408 = smul.addr %s407, 8
      %s409 = scalar_lea.vmem %s2, %s408
      // Predicated region
      $region25: #{_lambda_.4} parent=23 // pred_check
        %p410 = pneg %p60
      $region26: #{_lambda_.4} parent=23 // pred_check_branch
        %412 = sbr.rel (%p410) target = $region28
      $region27: #{_lambda_.4} parent=23 // pred_region
        %s413 = smul.u32 4, %s21
      $region28: #{_lambda_.4} parent=23 // pred_fallthru
        _
    $region24: #{_lambda_.4} parent=5 // pred_fallthru
      _
    %p414 = scmp.le.s32.totalorder 2, %s16
    // Predicated region
    $region29: #{_lambda_.4} parent=5 // pred_check
      %p415 = pneg %p414
    $region30: #{_lambda_.4} parent=5 // pred_check_branch
      %417 = sbr.rel (%p415) target = $region32
    $region31: #{_lambda_.4} parent=5 // pred_region
      %s418 = ssub.s32 %s16, 2
      // Predicated region
      $region33: #{_lambda_.4} parent=31 // pred_check
        %p419 = pneg %p66
      $region34: #{_lambda_.4} parent=31 // pred_check_branch
        %421 = sbr.rel (%p419) target = $region36
      $region35: #{_lambda_.4} parent=31 // pred_region
        %s422 = smul.u32 4, %s22
        %p423 = scmp.lt.s32.totalorder %s422, 7
        %s424 = scalar_select %p423, %s422, 7
        %s425 = smul.addr %s424, 8
        %s426 = scalar_lea.vmem %s2, %s425
      $region36: #{_lambda_.4} parent=31 // pred_fallthru
        _
    $region32: #{_lambda_.4} parent=5 // pred_fallthru
      _
  $region6: #{_lambda_.4} parent=0 // loop_footer
    %s20 = sadd.s32 1, %s16
  $region7: #{_lambda_.4} parent=0 // loop_footer_branch
    %15 = sbr.rel target = $region3
  $region8: #{_lambda_.4} parent=0 // loop_exit
    _

// kernel: _lambda_.3
$region0: #{_lambda_.3}
  #allocation0 [shape = 'u32[]', space=smem, size = 0x4, offset = 0x4, fixed_abs, tag = 'smem constant byte address 0x4 - core index']
  #allocation1 [shape = 'u32[72,128]{1,0:T(1,128)}', space=vmem, size = 0x9000, scoped, tag = 'internal scratch']
  #allocation2 [shape = 's32[1]{0}', space=sflag, size = 0x4, scoped, tag = 'scoped memory for _lambda_.3']
  #allocation3 [shape = 'u8[512]{0}', space=smem, size = 0x200, scoped, tag = 'prefetched SMEM operand 0']
  %s0 = inlined_call_operand.vmem [shape: s32[64], index: 0, kind: input, shape index: {}]
  %s1 = inlined_call_operand.vmem [shape: f32[256,128], index: 1, kind: input, shape index: {}]
  %s2 = inlined_call_operand.hbm [shape: f32[64,128], index: 2, kind: output, shape index: {}]
  %s3 = sld [smem:[#allocation0]]
  $region37: #{_lambda_.3} parent=0
    _
  %s5 = ssub.s32 1, %s3
  %s6 = scalar_select 0, %s5, %s3
  %s8 = sshll.u32 %s0, 4
  %s9 = int_to_ptr.vmem [resolvable:$true] %s8
  %11 = dma.vmem_to_smem %s9, 16, [#allocation3], [#allocation2]
  %13 = dma.done [#allocation2], 16
  %14 = sfence
  $region1: #{_lambda_.3} parent=0
    #allocation4 [shape = 'u8[32768]{0}', space=vmem, size = 0x8000, scoped, tag = 'output window, operand 0']
    #allocation5 [shape = 's32[2]{0}', space=sflag, size = 0x8, scoped, tag = 'scoped memory for _lambda_.3']
    %15 = vsyncpa [#allocation5], 0
    %s16 = scalar_lea.sflag [#allocation5], 1
    %17 = vsyncpa %s16, 0
    loop: start=0, step=1, limit=4
    $region2: #{_lambda_.3} parent=1 // loop_pre_header
      _
    $region3: #{_lambda_.3} parent=1 // loop_header
      %s19 = sphi 0, %s23
      %p20 = scmp.ge.s32.totalorder %s19, 4
      %s27 = sphi 0, %s27
      %s29 = sphi 0, %s27
      %s30 = sphi 0, %s29
      %s44 = sphi 0, %s30
      %s50 = sphi 0, %s52
      %s53 = sphi 0, %s50
      %s54 = sphi 0, %s53
      %s70 = sphi 0, %s54
    $region4: #{_lambda_.3} parent=1 // loop_header_branch
      %22 = sbr.rel (%p20) target = $region8
    $region5: #{_lambda_.3} parent=1 // loop_body
      %s24 = ssub.s32 %s19, 1
      %s25 = ssub.s32 %s19, 2
      %s26 = sadd.s32 %s19, 1
      %s28 = sadd.s32 %s27, 1
      %p31 = scmp.eq.s32.totalorder %s19, 1
      %p32 = scmp.ne.s32.totalorder %s27, %s29
      %p33 = scmp.eq.s32.totalorder %s19, 0
      %p34 = por %p32, %p33
      %p35 = scmp.ne.s32.totalorder %s27, %s29
      %p36 = scmp.eq.s32.totalorder %s24, 1
      %p37 = por %p35, %p36
      %p38 = scmp.ne.s32.totalorder %s29, %s30
      %p39 = scmp.eq.s32.totalorder %s24, 0
      %p40 = por %p38, %p39
      %p41 = scmp.ne.s32.totalorder %s29, %s30
      %p42 = scmp.eq.s32.totalorder %s25, 1
      %p43 = por %p41, %p42
      %p45 = scmp.ne.s32.totalorder %s30, %s44
      %p46 = scmp.eq.s32.totalorder %s25, 0
      %p47 = por %p45, %p46
      %s48 = ssub.s32 %s19, %s26
      %p49 = scmp.eq.s32.totalorder %s48, 0
      %s51 = sadd.s32 %s50, 1
      %s52 = scalar_select %p49, %s50, %s51
      %p55 = pneg %p49
      %p56 = scmp.eq.s32.totalorder %s19, 1
      %p57 = por %p55, %p56
      %p58 = scmp.ne.s32.totalorder %s50, %s53
      %p59 = scmp.eq.s32.totalorder %s19, 0
      %p60 = por %p58, %p59
      %p61 = scmp.ne.s32.totalorder %s50, %s53
      %p62 = scmp.eq.s32.totalorder %s24, 1
      %p63 = por %p61, %p62
      %p64 = scmp.ne.s32.totalorder %s53, %s54
      %p65 = scmp.eq.s32.totalorder %s24, 0
      %p66 = por %p64, %p65
      %p67 = scmp.ne.s32.totalorder %s53, %s54
      %p68 = scmp.eq.s32.totalorder %s25, 1
      %p69 = por %p67, %p68
      %p71 = scmp.ne.s32.totalorder %s54, %s70
      %p72 = scmp.eq.s32.totalorder %s25, 0
      %p73 = por %p71, %p72
      %p74 = scmp.le.s32.totalorder 1, %s19
      %p75 = scmp.lt.s32.totalorder %s19, 3
      %p76 = pnand %p74, %p75
      %p77 = pneg %p76
      // Predicated region
      $region9: #{_lambda_.3} parent=5 // pred_check
        _
      $region10: #{_lambda_.3} parent=5 // pred_check_branch
        %79 = sbr.rel (%p76) target = $region12
      $region11: #{_lambda_.3} parent=5 // pred_region
        %s80 = ssub.s32 %s19, 1
        // Predicated region
        $region13: #{_lambda_.3} parent=11 // pred_check
          %p81 = pneg %p40
        $region14: #{_lambda_.3} parent=11 // pred_check_branch
          %83 = sbr.rel (%p81) target = $region16
        $region15: #{_lambda_.3} parent=11 // pred_region
          _
        $region16: #{_lambda_.3} parent=11 // pred_fallthru
          _
      $region12: #{_lambda_.3} parent=5 // pred_fallthru
        _
      %p84 = scmp.lt.s32.totalorder %s19, 2
      // Predicated region
      $region17: #{_lambda_.3} parent=5 // pred_check
        %p85 = pneg %p84
      $region18: #{_lambda_.3} parent=5 // pred_check_branch
        %87 = sbr.rel (%p85) target = $region20
      $region19: #{_lambda_.3} parent=5 // pred_region
        _
      $region20: #{_lambda_.3} parent=5 // pred_fallthru
        _
      %p88 = scmp.le.s32.totalorder 1, %s19
      %p89 = scmp.lt.s32.totalorder %s19, 3
      %p90 = pnand %p88, %p89
      %p91 = pneg %p90
      // Predicated region
      $region21: #{_lambda_.3} parent=5 // pred_check
        _
      $region22: #{_lambda_.3} parent=5 // pred_check_branch
        %93 = sbr.rel (%p90) target = $region24
      $region23: #{_lambda_.3} parent=5 // pred_region
        %s94 = ssub.s32 %s19, 1
        %p95 = pneg %p40
        %p96 = pneg %p37
        %p97 = pneg %p66
        %p98 = pneg %p63
        %s99 = sand.u32 %s53, 1
        %s100 = scalar_lea.sflag [#allocation5], %s99
        %s101 = sand.u32 %s53, 1
        %s102 = smul.addr %s101, 32
        %s103 = scalar_lea.vmem [#allocation4], %s102
        %s104 = smul.u32 4, %s24
        %s105 = smul.u32 %s24, 32
        %s106 = sld [smem:[#allocation3 + %s105]]
        %s107 = scalar_lea.vmem %s1, %s106
        %v108 = vld [vmem:[%s107] sm:$0x1]
        %109 = vst [vmem:[%s103] sm:$0x1] %v108
        %s110 = sadd.s32 %s105, 1
        %s111 = sld [smem:[#allocation3 + %s110]]
        %s112 = scalar_lea.vmem %s1, %s111
        %v113 = vld [vmem:[%s112] sm:$0x1]
        %114 = vst [vmem:[%s103 + $0x1] sm:$0x1] %v113
        %s115 = sadd.s32 %s105, 2
        %s116 = sld [smem:[#allocation3 + %s115]]
        %s117 = scalar_lea.vmem %s1, %s116
        %v118 = vld [vmem:[%s117] sm:$0x1]
        %119 = vst [vmem:[%s103 + $0x2] sm:$0x1] %v118
        %s120 = sadd.s32 %s105, 3
        %s121 = sld [smem:[#allocation3 + %s120]]
        %s122 = scalar_lea.vmem %s1, %s121
        %v123 = vld [vmem:[%s122] sm:$0x1]
        %124 = vst [vmem:[%s103 + $0x3] sm:$0x1] %v123
        %s125 = sadd.s32 %s105, 4
        %s126 = sld [smem:[#allocation3 + %s125]]
        %s127 = scalar_lea.vmem %s1, %s126
        %v128 = vld [vmem:[%s127] sm:$0x1]
        %129 = vst [vmem:[%s103 + $0x4] sm:$0x1] %v128
        %s130 = sadd.s32 %s105, 5
        %s131 = sld [smem:[#allocation3 + %s130]]
        %s132 = scalar_lea.vmem %s1, %s131
        %v133 = vld [vmem:[%s132] sm:$0x1]
        %134 = vst [vmem:[%s103 + $0x5] sm:$0x1] %v133
        %s135 = sadd.s32 %s105, 6
        %s136 = sld [smem:[#allocation3 + %s135]]
        %s137 = scalar_lea.vmem %s1, %s136
        %v138 = vld [vmem:[%s137] sm:$0x1]
        %139 = vst [vmem:[%s103 + $0x6] sm:$0x1] %v138
        %s140 = sadd.s32 %s105, 7
        %s141 = sld [smem:[#allocation3 + %s140]]
        %s142 = scalar_lea.vmem %s1, %s141
        %v143 = vld [vmem:[%s142] sm:$0x1]
        %144 = vst [vmem:[%s103 + $0x7] sm:$0x1] %v143
        %s145 = sadd.s32 %s105, 8
        %s146 = sld [smem:[#allocation3 + %s145]]
        %s147 = scalar_lea.vmem %s1, %s146
        %v148 = vld [vmem:[%s147] sm:$0x1]
        %149 = vst [vmem:[%s103 + $0x8] sm:$0x1] %v148
        %s150 = sadd.s32 %s105, 9
        %s151 = sld [smem:[#allocation3 + %s150]]
        %s152 = scalar_lea.vmem %s1, %s151
        %v153 = vld [vmem:[%s152] sm:$0x1]
        %154 = vst [vmem:[%s103 + $0x9] sm:$0x1] %v153
        %s155 = sadd.s32 %s105, 10
        %s156 = sld [smem:[#allocation3 + %s155]]
        %s157 = scalar_lea.vmem %s1, %s156
        %v158 = vld [vmem:[%s157] sm:$0x1]
        %159 = vst [vmem:[%s103 + $0xa] sm:$0x1] %v158
        %s160 = sadd.s32 %s105, 11
        %s161 = sld [smem:[#allocation3 + %s160]]
        %s162 = scalar_lea.vmem %s1, %s161
        %v163 = vld [vmem:[%s162] sm:$0x1]
        %164 = vst [vmem:[%s103 + $0xb] sm:$0x1] %v163
        %s165 = sadd.s32 %s105, 12
        %s166 = sld [smem:[#allocation3 + %s165]]
        %s167 = scalar_lea.vmem %s1, %s166
        %v168 = vld [vmem:[%s167] sm:$0x1]
        %169 = vst [vmem:[%s103 + $0xc] sm:$0x1] %v168
        %s170 = sadd.s32 %s105, 13
        %s171 = sld [smem:[#allocation3 + %s170]]
        %s172 = scalar_lea.vmem %s1, %s171
        %v173 = vld [vmem:[%s172] sm:$0x1]
        %174 = vst [vmem:[%s103 + $0xd] sm:$0x1] %v173
        %s175 = sadd.s32 %s105, 14
        %s176 = sld [smem:[#allocation3 + %s175]]
        %s177 = scalar_lea.vmem %s1, %s176
        %v178 = vld [vmem:[%s177] sm:$0x1]
        %179 = vst [vmem:[%s103 + $0xe] sm:$0x1] %v178
        %s180 = sadd.s32 %s105, 15
        %s181 = sld [smem:[#allocation3 + %s180]]
        %s182 = scalar_lea.vmem %s1, %s181
        %v183 = vld [vmem:[%s182] sm:$0x1]
        %184 = vst [vmem:[%s103 + $0xf] sm:$0x1] %v183
        %s185 = sadd.s32 %s105, 16
        %s186 = sld [smem:[#allocation3 + %s185]]
        %s187 = scalar_lea.vmem %s1, %s186
        %v188 = vld [vmem:[%s187] sm:$0x1]
        %189 = vst [vmem:[%s103 + $0x10] sm:$0x1] %v188
        %s190 = sadd.s32 %s105, 17
        %s191 = sld [smem:[#allocation3 + %s190]]
        %s192 = scalar_lea.vmem %s1, %s191
        %v193 = vld [vmem:[%s192] sm:$0x1]
        %194 = vst [vmem:[%s103 + $0x11] sm:$0x1] %v193
        %s195 = sadd.s32 %s105, 18
        %s196 = sld [smem:[#allocation3 + %s195]]
        %s197 = scalar_lea.vmem %s1, %s196
        %v198 = vld [vmem:[%s197] sm:$0x1]
        %199 = vst [vmem:[%s103 + $0x12] sm:$0x1] %v198
        %s200 = sadd.s32 %s105, 19
        %s201 = sld [smem:[#allocation3 + %s200]]
        %s202 = scalar_lea.vmem %s1, %s201
        %v203 = vld [vmem:[%s202] sm:$0x1]
        %204 = vst [vmem:[%s103 + $0x13] sm:$0x1] %v203
        %s205 = sadd.s32 %s105, 20
        %s206 = sld [smem:[#allocation3 + %s205]]
        %s207 = scalar_lea.vmem %s1, %s206
        %v208 = vld [vmem:[%s207] sm:$0x1]
        %209 = vst [vmem:[%s103 + $0x14] sm:$0x1] %v208
        %s210 = sadd.s32 %s105, 21
        %s211 = sld [smem:[#allocation3 + %s210]]
        %s212 = scalar_lea.vmem %s1, %s211
        %v213 = vld [vmem:[%s212] sm:$0x1]
        %214 = vst [vmem:[%s103 + $0x15] sm:$0x1] %v213
        %s215 = sadd.s32 %s105, 22
        %s216 = sld [smem:[#allocation3 + %s215]]
        %s217 = scalar_lea.vmem %s1, %s216
        %v218 = vld [vmem:[%s217] sm:$0x1]
        %219 = vst [vmem:[%s103 + $0x16] sm:$0x1] %v218
        %s220 = sadd.s32 %s105, 23
        %s221 = sld [smem:[#allocation3 + %s220]]
        %s222 = scalar_lea.vmem %s1, %s221
        %v223 = vld [vmem:[%s222] sm:$0x1]
        %224 = vst [vmem:[%s103 + $0x17] sm:$0x1] %v223
        %s225 = sadd.s32 %s105, 24
        %s226 = sld [smem:[#allocation3 + %s225]]
        %s227 = scalar_lea.vmem %s1, %s226
        %v228 = vld [vmem:[%s227] sm:$0x1]
        %229 = vst [vmem:[%s103 + $0x18] sm:$0x1] %v228
        %s230 = sadd.s32 %s105, 25
        %s231 = sld [smem:[#allocation3 + %s230]]
        %s232 = scalar_lea.vmem %s1, %s231
        %v233 = vld [vmem:[%s232] sm:$0x1]
        %234 = vst [vmem:[%s103 + $0x19] sm:$0x1] %v233
        %s235 = sadd.s32 %s105, 26
        %s236 = sld [smem:[#allocation3 + %s235]]
        %s237 = scalar_lea.vmem %s1, %s236
        %v238 = vld [vmem:[%s237] sm:$0x1]
        %239 = vst [vmem:[%s103 + $0x1a] sm:$0x1] %v238
        %s240 = sadd.s32 %s105, 27
        %s241 = sld [smem:[#allocation3 + %s240]]
        %s242 = scalar_lea.vmem %s1, %s241
        %v243 = vld [vmem:[%s242] sm:$0x1]
        %244 = vst [vmem:[%s103 + $0x1b] sm:$0x1] %v243
        %s245 = sadd.s32 %s105, 28
        %s246 = sld [smem:[#allocation3 + %s245]]
        %s247 = scalar_lea.vmem %s1, %s246
        %v248 = vld [vmem:[%s247] sm:$0x1]
        %249 = vst [vmem:[%s103 + $0x1c] sm:$0x1] %v248
        %s250 = sadd.s32 %s105, 29
        %s251 = sld [smem:[#allocation3 + %s250]]
        %s252 = scalar_lea.vmem %s1, %s251
        %v253 = vld [vmem:[%s252] sm:$0x1]
        %254 = vst [vmem:[%s103 + $0x1d] sm:$0x1] %v253
        %s255 = sadd.s32 %s105, 30
        %s256 = sld [smem:[#allocation3 + %s255]]
        %s257 = scalar_lea.vmem %s1, %s256
        %v258 = vld [vmem:[%s257] sm:$0x1]
        %259 = vst [vmem:[%s103 + $0x1e] sm:$0x1] %v258
        %s260 = sadd.s32 %s105, 31
        %s261 = sld [smem:[#allocation3 + %s260]]
        %s262 = scalar_lea.vmem %s1, %s261
        %v263 = vld [vmem:[%s262] sm:$0x1]
        %264 = vst [vmem:[%s103 + $0x1f] sm:$0x1] %v263
        %v265 = vld [vmem:[%s103] sm:$0xff]
        %v266 = vld [vmem:[%s103 + $0x8] sm:$0xff]
        %v267 = vld [vmem:[%s103 + $0x10] sm:$0xff]
        %v268 = vld [vmem:[%s103 + $0x18] sm:$0xff]
        %v269 = vmul.f32 %v265, %v265
        %v270 = vmul.f32 %v266, %v266
        %v271 = vmul.f32 %v267, %v267
        %v272 = vmul.f32 %v268, %v268
        %273 = vadd.xlane.f32.xlu0 %v269
        %v274 = vpop.xlane.xlu0 %273
        %275 = vadd.xlane.f32.xlu0 %v270
        %v276 = vpop.xlane.xlu0 %275
        %277 = vadd.xlane.f32.xlu0 %v271
        %v278 = vpop.xlane.xlu0 %277
        %279 = vadd.xlane.f32.xlu0 %v272
        %v280 = vpop.xlane.xlu0 %279
        %v281 = vrsqrt.pop %v274
        %v282 = vmul.f32 %v281, %v274
        %v283 = vmul.f32 %v282, %v281
        %v284 = vmul.f32 0.5, %v283
        %v285 = vsub.f32 1.5, %v284
        %v286 = vmul.f32 %v281, %v285
        %v287 = vmul.f32 %v274, %v286
        %vm288 = vcmp.eq.f32.partialorder %v274, inf
        %v289 = vsel %vm288, %v274, %v287
        %vm290 = vcmp.eq.f32.partialorder %v274, 0.0
        %v291 = vand.u32 %v274, 2147483648
        %v292 = vsel %vm290, %v291, %v289
        %v293 = vrsqrt.pop %v276
        %v294 = vmul.f32 %v293, %v276
        %v295 = vmul.f32 %v294, %v293
        %v296 = vmul.f32 0.5, %v295
        %v297 = vsub.f32 1.5, %v296
        %v298 = vmul.f32 %v293, %v297
        %v299 = vmul.f32 %v276, %v298
        %vm300 = vcmp.eq.f32.partialorder %v276, inf
        %v301 = vsel %vm300, %v276, %v299
        %vm302 = vcmp.eq.f32.partialorder %v276, 0.0
        %v303 = vand.u32 %v276, 2147483648
        %v304 = vsel %vm302, %v303, %v301
        %v305 = vrsqrt.pop %v278
        %v306 = vmul.f32 %v305, %v278
        %v307 = vmul.f32 %v306, %v305
        %v308 = vmul.f32 0.5, %v307
        %v309 = vsub.f32 1.5, %v308
        %v310 = vmul.f32 %v305, %v309
        %v311 = vmul.f32 %v278, %v310
        %vm312 = vcmp.eq.f32.partialorder %v278, inf
        %v313 = vsel %vm312, %v278, %v311
        %vm314 = vcmp.eq.f32.partialorder %v278, 0.0
        %v315 = vand.u32 %v278, 2147483648
        %v316 = vsel %vm314, %v315, %v313
        %v317 = vrsqrt.pop %v280
        %v318 = vmul.f32 %v317, %v280
        %v319 = vmul.f32 %v318, %v317
        %v320 = vmul.f32 0.5, %v319
        %v321 = vsub.f32 1.5, %v320
        %v322 = vmul.f32 %v317, %v321
        %v323 = vmul.f32 %v280, %v322
        %vm324 = vcmp.eq.f32.partialorder %v280, inf
        %v325 = vsel %vm324, %v280, %v323
        %vm326 = vcmp.eq.f32.partialorder %v280, 0.0
        %v327 = vand.u32 %v280, 2147483648
        %v328 = vsel %vm326, %v327, %v325
        %v329 = vadd.f32 %v292, 1e-07
        %v330 = vadd.f32 %v304, 1e-07
        %v331 = vadd.f32 %v316, 1e-07
        %v332 = vadd.f32 %v328, 1e-07
        %v333 = vrcp.pop %v329
        %v334 = vmul.f32 %v329, %v333
        %v335 = vsub.f32 1.0, %v334
        %v336 = vmul.f32 %v333, %v335
        %v337 = vadd.f32 %v333, %v336
        %vm338 = vweird.f32 %v329
        %vm339 = vweird.f32 %v333
        %vm340 = vmor %vm338, %vm339
        %v341 = vsel %vm340, %v333, %v337
        %v342 = vand.u32 2147483647, %v329
        %vm343 = vcmp.eq.f32.partialorder %v342, 8.507059e+37
        %v344 = vand.u32 %v329, 2147483648
        %v345 = vor.u32 1.1754944e-38, %v344
        %v346 = vsel %vm343, %v345, %v341
        %v347 = vrcp.pop %v330
        %v348 = vmul.f32 %v330, %v347
        %v349 = vsub.f32 1.0, %v348
        %v350 = vmul.f32 %v347, %v349
        %v351 = vadd.f32 %v347, %v350
        %vm352 = vweird.f32 %v330
        %vm353 = vweird.f32 %v347
        %vm354 = vmor %vm352, %vm353
        %v355 = vsel %vm354, %v347, %v351
        %v356 = vand.u32 2147483647, %v330
        %vm357 = vcmp.eq.f32.partialorder %v356, 8.507059e+37
        %v358 = vand.u32 %v330, 2147483648
        %v359 = vor.u32 1.1754944e-38, %v358
        %v360 = vsel %vm357, %v359, %v355
        %v361 = vrcp.pop %v331
        %v362 = vmul.f32 %v331, %v361
        %v363 = vsub.f32 1.0, %v362
        %v364 = vmul.f32 %v361, %v363
        %v365 = vadd.f32 %v361, %v364
        %vm366 = vweird.f32 %v331
        %vm367 = vweird.f32 %v361
        %vm368 = vmor %vm366, %vm367
        %v369 = vsel %vm368, %v361, %v365
        %v370 = vand.u32 2147483647, %v331
        %vm371 = vcmp.eq.f32.partialorder %v370, 8.507059e+37
        %v372 = vand.u32 %v331, 2147483648
        %v373 = vor.u32 1.1754944e-38, %v372
        %v374 = vsel %vm371, %v373, %v369
        %v375 = vrcp.pop %v332
        %v376 = vmul.f32 %v332, %v375
        %v377 = vsub.f32 1.0, %v376
        %v378 = vmul.f32 %v375, %v377
        %v379 = vadd.f32 %v375, %v378
        %vm380 = vweird.f32 %v332
        %vm381 = vweird.f32 %v375
        %vm382 = vmor %vm380, %vm381
        %v383 = vsel %vm382, %v375, %v379
        %v384 = vand.u32 2147483647, %v332
        %vm385 = vcmp.eq.f32.partialorder %v384, 8.507059e+37
        %v386 = vand.u32 %v332, 2147483648
        %v387 = vor.u32 1.1754944e-38, %v386
        %v388 = vsel %vm385, %v387, %v383
        %v389 = vmul.f32 %v265, %v346
        %v390 = vmul.f32 %v266, %v360
        %v391 = vmul.f32 %v267, %v374
        %v392 = vmul.f32 %v268, %v388
        %393 = vst [vmem:[%s103] sm:$0xff] %v389
        %394 = vst [vmem:[%s103 + $0x8] sm:$0xff] %v390
        %395 = vst [vmem:[%s103 + $0x10] sm:$0xff] %v391
        %396 = vst [vmem:[%s103 + $0x18] sm:$0xff] %v392
        %s397 = sand.u32 %s53, 1
        %s398 = scalar_lea.sflag [#allocation5], %s397
        %s399 = sand.u32 %s53, 1
        %s400 = smul.addr %s399, 32
        %s401 = scalar_lea.vmem [#allocation4], %s400
        // Predicated region
        $region25: #{_lambda_.3} parent=23 // pred_check
          %p402 = pneg %p63
        $region26: #{_lambda_.3} parent=23 // pred_check_branch
          %404 = sbr.rel (%p402) target = $region28
        $region27: #{_lambda_.3} parent=23 // pred_region
          %s405 = smul.u32 4, %s24
          %407 = vsyncadd %s398, 0
          %s408 = smul.addr %s405, 8
          %s409 = scalar_lea.hbm %s2, %s408
          %s410 = sshll.u32 %s401, 4
          %s411 = int_to_ptr.vmem [resolvable:$true] %s410
          %s412 = sshll.u32 %s409, 4
          %s413 = int_to_ptr.hbm [resolvable:$true] %s412
          %418 = dma.vmem_to_hbm [thread:$0]  %s411, 512, %s413, %s398, 128, 128, 8
        $region28: #{_lambda_.3} parent=23 // pred_fallthru
          _
      $region24: #{_lambda_.3} parent=5 // pred_fallthru
        _
      %p419 = scmp.le.s32.totalorder 2, %s19
      // Predicated region
      $region29: #{_lambda_.3} parent=5 // pred_check
        %p420 = pneg %p419
      $region30: #{_lambda_.3} parent=5 // pred_check_branch
        %422 = sbr.rel (%p420) target = $region32
      $region31: #{_lambda_.3} parent=5 // pred_region
        %s423 = ssub.s32 %s19, 2
        // Predicated region
        $region33: #{_lambda_.3} parent=31 // pred_check
          %p424 = pneg %p69
        $region34: #{_lambda_.3} parent=31 // pred_check_branch
          %426 = sbr.rel (%p424) target = $region36
        $region35: #{_lambda_.3} parent=31 // pred_region
          %s427 = sand.u32 %s54, 1
          %s428 = scalar_lea.sflag [#allocation5], %s427
          %s429 = sand.u32 %s54, 1
          %s430 = smul.addr %s429, 32
          %s431 = scalar_lea.vmem [#allocation4], %s430
          %433 = dma.done %s428, 512
        $region36: #{_lambda_.3} parent=31 // pred_fallthru
          _
      $region32: #{_lambda_.3} parent=5 // pred_fallthru
        _
    $region6: #{_lambda_.3} parent=1 // loop_footer
      %s23 = sadd.s32 1, %s19
    $region7: #{_lambda_.3} parent=1 // loop_footer_branch
      %18 = sbr.rel target = $region3
    $region8: #{_lambda_.3} parent=1 // loop_exit
      _
    %434 = vsyncpa [#allocation5], 1
    %s435 = scalar_lea.sflag [#allocation5], 1
    %436 = vsyncpa %s435, 1

</llo_original>
